<compile_context>
chip_gen: v7x
topology: tpu7x:2x2x1
jax: 0.10.0
libtpu: 0.0.40
codegen_flags: <defaults>
</compile_context>

<pallas_src>
import functools

import numpy as np

import jax
import jax.numpy as jnp
from jax import lax
from jax.experimental import pallas as pl
from jax.experimental.pallas import tpu as pltpu

Q = 0.4        # LQLoss q
ALPHA = 0.0    # LQLoss alpha (default, non-ablation branch)
LANES = 128    # TPU lane width: fused class axis is zero-padded to this


def bert_linear_kernel(x_ref, mseq_ref, w_ref, aux_ref, onehot_ref,
                       logits_ref, terms_ref, pool_ref, den_ref,
                       *, num_cat, num_pol):
    s = pl.program_id(1)
    ns = pl.num_programs(1)

    @pl.when(s == 0)
    def _init():
        pool_ref[...] = jnp.zeros_like(pool_ref)
        den_ref[...] = jnp.zeros_like(den_ref)

    x = x_ref[...]                                   # (bb, tS, H) bf16 (or f32)
    bb, tS, H = x.shape
    m_full = mseq_ref[0]                             # (bb, ts_lanes) f32, lane-padded
    m = m_full[:, :tS]                               # (bb, tS) static lane slice

    # ---- masked-sum pooling on the MXU -------------------------------------
    # sel[b, r*tS + t] = mask[b, t] if r == b else 0; one 2-D matmul contracts
    # all batch*seq rows of this tile in a single MXU pass (multiply+add off
    # the VPU; the VPU only builds the small (bb, bb*tS) selection operand).
    rowi = lax.broadcasted_iota(jnp.int32, (bb, tS), 0)
    pieces = [jnp.where(rowi == r, m, 0.0) for r in range(bb)]
    sel = jnp.concatenate(pieces, axis=1).astype(x.dtype)     # (bb, bb*tS)
    x2 = x.reshape(bb * tS, H)                                # leading-dim collapse
    pool_ref[...] += jnp.dot(sel, x2, preferred_element_type=jnp.float32)
    den_ref[...] += jnp.sum(m, axis=1, keepdims=True)         # mask count per row

    # ---- heads + LQ loss, once per batch block (last seq step) -------------
    @pl.when(s == ns - 1)
    def _finalize():
        den = jnp.maximum(den_ref[...], 1.0)                  # guard padded rows
        se = pool_ref[...] / den                              # (bb, H) f32 pooled mean

        bias = aux_ref[0:1, :]                                # (1, LANES): b_cat|b_pol|0
        lw = aux_ref[1:2, :]                                  # (1, LANES): softmax(-log w)

        # One fused, lane-dense MXU matmul for both heads + unmasked vst.
        logits = jnp.dot(se, w_ref[...],
                         preferred_element_type=jnp.float32) + bias
        logits_ref[...] = logits                              # (bb, 128)

        onehot = onehot_ref[...]                              # (bb, LANES) fused one-hot
        col = lax.broadcasted_iota(jnp.int32, logits.shape, 1)
        head_cat = (col < num_cat).astype(jnp.float32)
        head_pol = jnp.logical_and(col >= num_cat,
                                   col < num_cat + num_pol).astype(jnp.float32)

        def head_terms(head_mask):
            # masked softmax over this head's class columns only
            z = jnp.where(head_mask > 0.0, logits, -1e30)
            mx = jnp.max(z, axis=-1, keepdims=True)
            e = jnp.exp(z - mx) * head_mask
            d = jnp.sum(e, axis=-1, keepdims=True)
            r = pl.reciprocal(d, approx=True)
            r = r * (2.0 - d * r)                  # one Newton step -> ~exact 1/d
            p = e * r
            yq = jnp.sum(p * onehot, axis=-1, keepdims=True)  # softmax @ target
            yq = jnp.maximum(yq, 1e-12)                       # NaN insurance
            lq = (1.0 - jnp.exp(Q * jnp.log(yq))) / Q
            wg = jnp.sum(lw * onehot * head_mask, axis=-1, keepdims=True)
            return ALPHA * lq + (1.0 - ALPHA) * lq * wg       # (bb, 1) per-row term

        t_cat = head_terms(head_cat)
        t_pol = head_terms(head_pol)
        # lane 0 = cat term, lane 1 = pol term, rest 0 (lane-dense store);
        # mean / square / add are finished in the wrapper so the batch axis
        # can stay megacore-parallel.
        terms_ref[...] = jnp.where(col == 0, t_cat,
                                   jnp.where(col == 1, t_pol, 0.0))


def _round_up(n, m):
    return -(-n // m) * m


def bert_linear_forward(x, attention_mask,
                        w_cat, b_cat, w_pol, b_pol,
                        aspect_weights, sentiment_weights,
                        labels_cat, labels_pol,
                        *, block_b=None, seq_block=None, x_dtype=jnp.bfloat16):
    """Fused masked-mean pool + two Linear heads + LQLoss.

    Tile-size guidance (x streamed in x_dtype, accumulation in f32):
      v5e : block_b=64, seq_block=32  (bf16 x tile ~3 MiB; 16 MiB scoped default)
      v6e : block_b=64, seq_block=128 (bf16 x tile ~12 MiB; raise vmem limit)
      v7x : block_b=128, seq_block=32..64 (stay well under 64 MiB physical VMEM)
    """
    B, S, H = x.shape
    num_cat = w_cat.shape[1]
    num_pol = w_pol.shape[1]
    C = num_cat + num_pol
    assert C <= LANES

    f32 = jnp.float32
    x_dtype = np.dtype(x_dtype)
    sub = 16 if x_dtype.itemsize == 2 else 8       # sublane granularity of x tile

    if block_b is None:
        block_b = min(_round_up(B, 8), 64)
    block_b = _round_up(block_b, 8)
    if seq_block is None:
        seq_block = min(_round_up(S, sub), 128)
    tS = _round_up(seq_block, sub)

    B_pad = _round_up(B, block_b)
    S_pad = _round_up(S, tS)
    nb, ns = B_pad // block_b, S_pad // tS
    ts_lanes = _round_up(tS, LANES)

    # x: bf16 cast for the DMA; pad only the missing tail rows / seq positions.
    # When B % block_b == 0, S % tS == 0 and the encoder already emits bf16,
    # this is a pure pass-through (no wrapper-side copy of the big activation).
    x_c = x if x.dtype == x_dtype else x.astype(x_dtype)
    if S_pad != S:
        x_c = jnp.concatenate(
            [x_c, jnp.zeros((B, S_pad - S, H), x_dtype)], axis=1)
    if B_pad != B:
        x_c = jnp.concatenate(
            [x_c, jnp.zeros((B_pad - B, x_c.shape[1], H), x_dtype)], axis=0)

    # Attention mask re-laid-out per seq tile: (ns, B_pad, ts_lanes), zero padded.
    m = jnp.zeros((B_pad, S_pad), f32).at[:B, :S].set(attention_mask.astype(f32))
    m_tiles = m.reshape(B_pad, ns, tS).transpose(1, 0, 2)       # (ns, B_pad, tS)
    if ts_lanes != tS:
        m_tiles = jnp.pad(m_tiles, ((0, 0), (0, 0), (0, ts_lanes - tS)))

    # One fused, zero-padded (H, 128) weight for both heads.
    w_all = (jnp.zeros((H, LANES), f32)
             .at[:, :num_cat].set(w_cat.astype(f32))
             .at[:, num_cat:C].set(w_pol.astype(f32)))

    # aux buffer: row 0 = fused bias, row 1 = fused LQLoss weight softmax(-log w).
    lw_cat = jax.nn.softmax(-jnp.log(aspect_weights.astype(f32)))
    lw_pol = jax.nn.softmax(-jnp.log(sentiment_weights.astype(f32)))
    aux = (jnp.zeros((8, LANES), f32)
           .at[0, :num_cat].set(b_cat.astype(f32))
           .at[0, num_cat:C].set(b_pol.astype(f32))
           .at[1, :num_cat].set(lw_cat)
           .at[1, num_cat:C].set(lw_pol))

    # Combined target one-hot in the fused class lane space (padded rows = 0).
    onehot = (jax.nn.one_hot(labels_cat, LANES, dtype=f32) +
              jax.nn.one_hot(labels_pol + num_cat, LANES, dtype=f32))
    onehot_p = jnp.zeros((B_pad, LANES), f32).at[:B].set(onehot)

    # Explicit VMEM budget (double-buffered inputs/outputs + scratch).
    vmem_needed = (2 * block_b * tS * H * x_dtype.itemsize     # x tile
                   + 2 * block_b * ts_lanes * 4                # mask tile
                   + 2 * H * LANES * 4                         # fused weight
                   + 2 * 8 * LANES * 4                         # aux
                   + 2 * 3 * block_b * LANES * 4               # onehot + 2 outputs
                   + block_b * (H + LANES) * 4)                # pool/den scratch
    if vmem_needed > (48 << 20):
        raise ValueError("reduce block_b/seq_block: tile set exceeds v7x VMEM budget")
    vmem_limit = int(min(max(2 * vmem_needed, 32 << 20), 64 << 20))

    kernel = functools.partial(bert_linear_kernel,
                               num_cat=num_cat, num_pol=num_pol)

    logits_all, terms = pl.pallas_call(
        kernel,
        out_shape=(jax.ShapeDtypeStruct((B_pad, LANES), f32),
                   jax.ShapeDtypeStruct((B_pad, LANES), f32)),
        grid=(nb, ns),
        in_specs=[
            pl.BlockSpec((block_b, tS, H), lambda i, s: (i, s, 0)),
            pl.BlockSpec((1, block_b, ts_lanes), lambda i, s: (s, i, 0)),
            pl.BlockSpec((H, LANES), lambda i, s: (0, 0)),      # weight resident
            pl.BlockSpec((8, LANES), lambda i, s: (0, 0)),      # bias + lw packed
            pl.BlockSpec((block_b, LANES), lambda i, s: (i, 0)),
        ],
        out_specs=(
            pl.BlockSpec((block_b, LANES), lambda i, s: (i, 0)),   # logits
            pl.BlockSpec((block_b, LANES), lambda i, s: (i, 0)),   # per-row loss terms
        ),
        scratch_shapes=[pltpu.VMEM((block_b, H), f32),     # pooled masked-sum acc
                        pltpu.VMEM((block_b, 1), f32)],    # mask-count acc
        compiler_params=pltpu.CompilerParams(
            # batch axis independent across blocks -> megacore "parallel";
            # seq axis carries the pool accumulator -> "arbitrary".
            dimension_semantics=("parallel", "arbitrary"),
            vmem_limit_bytes=vmem_limit),
    )(x_c, m_tiles, w_all, aux, onehot_p)

    loss = (jnp.square(jnp.sum(terms[:B, 0]) / B) +
            jnp.square(jnp.sum(terms[:B, 1]) / B))
    return (loss,
            logits_all[:B, :num_cat],
            logits_all[:B, num_cat:C])


def _reference_forward(x, attention_mask,
                       w_cat, b_cat, w_pol, b_pol,
                       aspect_weights, sentiment_weights,
                       labels_cat, labels_pol):
    """Pure-JAX f32 reference mirroring the PyTorch forward."""
    mask = attention_mask.astype(jnp.float32)
    se = (x * mask[:, :, None]).sum(axis=1) / mask.sum(axis=1, keepdims=True)
    logits_cat = se @ w_cat + b_cat
    logits_pol = se @ w_pol + b_pol

    def lq(logits, labels, weight):
        p = jax.nn.softmax(logits, axis=-1)
        yq = jnp.take_along_axis(p, labels[:, None], axis=1)
        lqv = (1.0 - yq ** Q) / Q
        lw = jax.nn.softmax(-jnp.log(weight))
        wg = jnp.take_along_axis(jnp.broadcast_to(lw, p.shape), labels[:, None], axis=1)
        return jnp.square(jnp.mean(ALPHA * lqv + (1 - ALPHA) * lqv * wg))

    loss = lq(logits_cat, labels_cat, aspect_weights) + \
           lq(logits_pol, labels_pol, sentiment_weights)
    return loss, logits_cat, logits_pol


if __name__ == "__main__":
    key = jax.random.PRNGKey(0)
    B, S, H = 12, 32, 768          # BERT hidden size is fixed to 768 by the module
    num_cat, num_pol = 9, 3

    keys = jax.random.split(key, 9)
    x = jax.random.normal(keys[0], (B, S, H), jnp.float32)
    lens = jnp.array([32, 5, 17, 32, 9, 28, 3, 31, 12, 20, 7, 26], dtype=jnp.int32)
    attention_mask = (jnp.arange(S)[None, :] < lens[:, None]).astype(jnp.int32)
    w_cat = jax.random.normal(keys[1], (H, num_cat), jnp.float32) * 0.02
    b_cat = jax.random.normal(keys[2], (num_cat,), jnp.float32) * 0.02
    w_pol = jax.random.normal(keys[3], (H, num_pol), jnp.float32) * 0.02
    b_pol = jax.random.normal(keys[4], (num_pol,), jnp.float32) * 0.02
    aspect_weights = jax.random.uniform(keys[5], (num_cat,), jnp.float32, 0.1, 1.0)
    sentiment_weights = jax.random.uniform(keys[6], (num_pol,), jnp.float32, 0.1, 1.0)
    labels_cat = jax.random.randint(keys[7], (B,), 0, num_cat, dtype=jnp.int32)
    labels_pol = jax.random.randint(keys[8], (B,), 0, num_pol, dtype=jnp.int32)

    # block_b=8, seq_block=16 -> grid (2 batch blocks [parallel], 2 seq blocks
    # [arbitrary]); exercises the pool accumulation and the batch tail padding.
    loss, logits_cat, logits_pol = bert_linear_forward(
        x, attention_mask, w_cat, b_cat, w_pol, b_pol,
        aspect_weights, sentiment_weights, labels_cat, labels_pol,
        block_b=8, seq_block=16)
    jax.block_until_ready((loss, logits_cat, logits_pol))

    ref_loss, ref_cat, ref_pol = _reference_forward(
        x, attention_mask, w_cat, b_cat, w_pol, b_pol,
        aspect_weights, sentiment_weights, labels_cat, labels_pol)

    # Tolerances account for the bf16 activation path (x is streamed in bf16,
    # per perf review) on top of the f32 reference; accumulation is f32 and the
    # softmax reciprocal is Newton-refined, so ~1e-3-level logit error remains.
    assert jnp.allclose(logits_cat, ref_cat, atol=2e-2, rtol=2e-2)
    assert jnp.allclose(logits_pol, ref_pol, atol=2e-2, rtol=2e-2)
    assert jnp.allclose(loss, ref_loss, atol=1e-4, rtol=3e-2)

    print("KERNEL_OK")
</pallas_src>

<mosaic_0001>
module attributes {stable_mosaic.version = 11 : i64} {
  func.func @bert_linear_kernel(%arg0: i32, %arg1: i32, %arg2: memref<8x16x768xbf16, #tpu.memory_space<vmem>>, %arg3: memref<1x8x128xf32, #tpu.memory_space<vmem>>, %arg4: memref<768x128xf32, #tpu.memory_space<vmem>>, %arg5: memref<8x128xf32, #tpu.memory_space<vmem>>, %arg6: memref<8x128xf32, #tpu.memory_space<vmem>>, %arg7: memref<8x128xf32, #tpu.memory_space<vmem>>, %arg8: memref<8x128xf32, #tpu.memory_space<vmem>>, %arg9: memref<8x768xf32, #tpu.memory_space<vmem>>, %arg10: memref<8x1xf32, #tpu.memory_space<vmem>>) attributes {dimension_semantics = [#tpu.dimension_semantics<parallel>, #tpu.dimension_semantics<arbitrary>], iteration_bounds = array<i64: 2, 2>, scalar_prefetch = 0 : i64, scratch_operands = 2 : i64, tpu.core_type = #tpu.core_type<tc>, window_params = [{transform_indices = @transform_0, window_bounds = array<i64: 8, 16, 768>}, {transform_indices = @transform_1, window_bounds = array<i64: 1, 8, 128>}, {pipeline_mode = #tpu.pipeline_mode<synchronous>, transform_indices = @transform_2, window_bounds = array<i64: 768, 128>}, {pipeline_mode = #tpu.pipeline_mode<synchronous>, transform_indices = @transform_3, window_bounds = array<i64: 8, 128>}, {transform_indices = @transform_4, window_bounds = array<i64: 8, 128>}, {transform_indices = @transform_5, window_bounds = array<i64: 8, 128>}, {transform_indices = @transform_6, window_bounds = array<i64: 8, 128>}]} {
    %c0_i32 = arith.constant 0 : i32
    %0 = arith.cmpi eq, %arg1, %c0_i32 : i32
    %1 = arith.extui %0 : i1 to i32
    %c0_i32_0 = arith.constant 0 : i32
    %2 = arith.cmpi ne, %1, %c0_i32_0 : i32
    scf.if %2 {
      %cst_26 = arith.constant 0.000000e+00 : f32
      %55 = vector.broadcast %cst_26 : f32 to vector<8x768xf32>
      %c0_27 = arith.constant 0 : index
      %c0_28 = arith.constant 0 : index
      %56 = vector.load %arg9[%c0_27, %c0_28] : memref<8x768xf32, #tpu.memory_space<vmem>>, vector<8x768xf32>
      tpu.vector_store %arg9[%c0_27, %c0_28], %55 {strides = array<i32>} : memref<8x768xf32, #tpu.memory_space<vmem>>, vector<8x768xf32>,
      %cst_29 = arith.constant 0.000000e+00 : f32
      %57 = vector.broadcast %cst_29 : f32 to vector<8x1xf32>
      %c0_30 = arith.constant 0 : index
      %c0_31 = arith.constant 0 : index
      %58 = vector.load %arg10[%c0_30, %c0_31] : memref<8x1xf32, #tpu.memory_space<vmem>>, vector<8x1xf32>
      tpu.vector_store %arg10[%c0_30, %c0_31], %57 {strides = array<i32>} : memref<8x1xf32, #tpu.memory_space<vmem>>, vector<8x1xf32>,
    } else {
    }
    %c0 = arith.constant 0 : index
    %c0_1 = arith.constant 0 : index
    %c0_2 = arith.constant 0 : index
    %3 = vector.load %arg2[%c0, %c0_1, %c0_2] : memref<8x16x768xbf16, #tpu.memory_space<vmem>>, vector<8x16x768xbf16>
    %c0_3 = arith.constant 0 : index
    %c0_4 = arith.constant 0 : index
    %c0_5 = arith.constant 0 : index
    %4 = vector.load %arg3[%c0_3, %c0_4, %c0_5] : memref<1x8x128xf32, #tpu.memory_space<vmem>>, vector<1x8x128xf32>
    %5 = vector.shape_cast %4 : vector<1x8x128xf32> to vector<8x128xf32>
    %6 = vector.extract_strided_slice %5 {offsets = [0, 0], sizes = [8, 16], strides = [1, 1]} : vector<8x128xf32> to vector<8x16xf32>
    %7 = tpu.iota {dimensions = array<i32: 0>} : vector<8x16xi32>
    %c0_i32_6 = arith.constant 0 : i32
    %8 = vector.broadcast %c0_i32_6 : i32 to vector<8x16xi32>
    %9 = arith.cmpi eq, %7, %8 : vector<8x16xi32>
    %cst = arith.constant 0.000000e+00 : f32
    %10 = vector.broadcast %cst : f32 to vector<8x16xf32>
    %11 = arith.select %9, %6, %10 : vector<8x16xi1>, vector<8x16xf32>
    %c1_i32 = arith.constant 1 : i32
    %12 = vector.broadcast %c1_i32 : i32 to vector<8x16xi32>
    %13 = arith.cmpi eq, %7, %12 : vector<8x16xi32>
    %cst_7 = arith.constant 0.000000e+00 : f32
    %14 = vector.broadcast %cst_7 : f32 to vector<8x16xf32>
    %15 = arith.select %13, %6, %14 : vector<8x16xi1>, vector<8x16xf32>
    %c2_i32 = arith.constant 2 : i32
    %16 = vector.broadcast %c2_i32 : i32 to vector<8x16xi32>
    %17 = arith.cmpi eq, %7, %16 : vector<8x16xi32>
    %cst_8 = arith.constant 0.000000e+00 : f32
    %18 = vector.broadcast %cst_8 : f32 to vector<8x16xf32>
    %19 = arith.select %17, %6, %18 : vector<8x16xi1>, vector<8x16xf32>
    %c3_i32 = arith.constant 3 : i32
    %20 = vector.broadcast %c3_i32 : i32 to vector<8x16xi32>
    %21 = arith.cmpi eq, %7, %20 : vector<8x16xi32>
    %cst_9 = arith.constant 0.000000e+00 : f32
    %22 = vector.broadcast %cst_9 : f32 to vector<8x16xf32>
    %23 = arith.select %21, %6, %22 : vector<8x16xi1>, vector<8x16xf32>
    %c4_i32 = arith.constant 4 : i32
    %24 = vector.broadcast %c4_i32 : i32 to vector<8x16xi32>
    %25 = arith.cmpi eq, %7, %24 : vector<8x16xi32>
    %cst_10 = arith.constant 0.000000e+00 : f32
    %26 = vector.broadcast %cst_10 : f32 to vector<8x16xf32>
    %27 = arith.select %25, %6, %26 : vector<8x16xi1>, vector<8x16xf32>
    %c5_i32 = arith.constant 5 : i32
    %28 = vector.broadcast %c5_i32 : i32 to vector<8x16xi32>
    %29 = arith.cmpi eq, %7, %28 : vector<8x16xi32>
    %cst_11 = arith.constant 0.000000e+00 : f32
    %30 = vector.broadcast %cst_11 : f32 to vector<8x16xf32>
    %31 = arith.select %29, %6, %30 : vector<8x16xi1>, vector<8x16xf32>
    %c6_i32 = arith.constant 6 : i32
    %32 = vector.broadcast %c6_i32 : i32 to vector<8x16xi32>
    %33 = arith.cmpi eq, %7, %32 : vector<8x16xi32>
    %cst_12 = arith.constant 0.000000e+00 : f32
    %34 = vector.broadcast %cst_12 : f32 to vector<8x16xf32>
    %35 = arith.select %33, %6, %34 : vector<8x16xi1>, vector<8x16xf32>
    %c7_i32 = arith.constant 7 : i32
    %36 = vector.broadcast %c7_i32 : i32 to vector<8x16xi32>
    %37 = arith.cmpi eq, %7, %36 : vector<8x16xi32>
    %cst_13 = arith.constant 0.000000e+00 : f32
    %38 = vector.broadcast %cst_13 : f32 to vector<8x16xf32>
    %39 = arith.select %37, %6, %38 : vector<8x16xi1>, vector<8x16xf32>
    %40 = tpu.concatenate %11, %15, %19, %23, %27, %31, %35, %39 in 1 : vector<8x16xf32>, vector<8x16xf32>, vector<8x16xf32>, vector<8x16xf32>, vector<8x16xf32>, vector<8x16xf32>, vector<8x16xf32>, vector<8x16xf32> -> vector<8x128xf32>
    %41 = arith.truncf %40 : vector<8x128xf32> to vector<8x128xbf16>
    %42 = vector.shape_cast %3 : vector<8x16x768xbf16> to vector<128x768xbf16>
    %c0_14 = arith.constant 0 : index
    %c0_15 = arith.constant 0 : index
    %43 = vector.load %arg9[%c0_14, %c0_15] : memref<8x768xf32, #tpu.memory_space<vmem>>, vector<8x768xf32>
    %cst_16 = arith.constant dense<0.000000e+00> : vector<8x768xf32>
    %44 = tpu.matmul %41, %42, %cst_16 {dimension_numbers = #tpu.dot_dimension_numbers<[1], [0], [0], [1], [0, 0, 1, 1], [], []>} : vector<8x128xbf16>, vector<128x768xbf16>, vector<8x768xf32> -> vector<8x768xf32>
    %45 = arith.addf %43, %44 : vector<8x768xf32>
    %c0_17 = arith.constant 0 : index
    %c0_18 = arith.constant 0 : index
    %46 = vector.load %arg9[%c0_17, %c0_18] : memref<8x768xf32, #tpu.memory_space<vmem>>, vector<8x768xf32>
    tpu.vector_store %arg9[%c0_17, %c0_18], %45 {strides = array<i32>} : memref<8x768xf32, #tpu.memory_space<vmem>>, vector<8x768xf32>,
    %c0_19 = arith.constant 0 : index
    %c0_20 = arith.constant 0 : index
    %47 = vector.load %arg10[%c0_19, %c0_20] : memref<8x1xf32, #tpu.memory_space<vmem>>, vector<8x1xf32>
    %cst_21 = arith.constant dense<0.000000e+00> : vector<8xf32>
    %48 = vector.multi_reduction <add>, %6, %cst_21 [1] : vector<8x16xf32> to vector<8xf32>
    %49 = vector.shape_cast %48 : vector<8xf32> to vector<8x1xf32>
    %50 = arith.addf %47, %49 : vector<8x1xf32>
    %c0_22 = arith.constant 0 : index
    %c0_23 = arith.constant 0 : index
    %51 = vector.load %arg10[%c0_22, %c0_23] : memref<8x1xf32, #tpu.memory_space<vmem>>, vector<8x1xf32>
    tpu.vector_store %arg10[%c0_22, %c0_23], %50 {strides = array<i32>} : memref<8x1xf32, #tpu.memory_space<vmem>>, vector<8x1xf32>,
    %c1_i32_24 = arith.constant 1 : i32
    %52 = arith.cmpi eq, %arg1, %c1_i32_24 : i32
    %53 = arith.extui %52 : i1 to i32
    %c0_i32_25 = arith.constant 0 : i32
    %54 = arith.cmpi ne, %53, %c0_i32_25 : i32
    scf.if %54 {
      %c0_26 = arith.constant 0 : index
      %c0_27 = arith.constant 0 : index
      %55 = vector.load %arg10[%c0_26, %c0_27] : memref<8x1xf32, #tpu.memory_space<vmem>>, vector<8x1xf32>
      %cst_28 = arith.constant 1.000000e+00 : f32
      %56 = vector.broadcast %cst_28 : f32 to vector<8x1xf32>
      %57 = arith.maximumf %55, %56 : vector<8x1xf32>
      %c0_29 = arith.constant 0 : index
      %c0_30 = arith.constant 0 : index
      %58 = vector.load %arg9[%c0_29, %c0_30] : memref<8x768xf32, #tpu.memory_space<vmem>>, vector<8x768xf32>
      %59 = vector.broadcast %57 : vector<8x1xf32> to vector<8x768xf32>
      %60 = arith.divf %58, %59 : vector<8x768xf32>
      %c0_31 = arith.constant 0 : index
      %c0_32 = arith.constant 0 : index
      %61 = vector.load %arg5[%c0_31, %c0_32] : memref<8x128xf32, #tpu.memory_space<vmem>>, vector<1x128xf32>
      %c1 = arith.constant 1 : index
      %c0_33 = arith.constant 0 : index
      %62 = vector.load %arg5[%c1, %c0_33] : memref<8x128xf32, #tpu.memory_space<vmem>>, vector<1x128xf32>
      %c0_34 = arith.constant 0 : index
      %c0_35 = arith.constant 0 : index
      %63 = vector.load %arg4[%c0_34, %c0_35] : memref<768x128xf32, #tpu.memory_space<vmem>>, vector<768x128xf32>
      %cst_36 = arith.constant dense<0.000000e+00> : vector<8x128xf32>
      %64 = tpu.matmul %60, %63, %cst_36 {dimension_numbers = #tpu.dot_dimension_numbers<[1], [0], [0], [1], [0, 0, 1, 1], [], []>} : vector<8x768xf32>, vector<768x128xf32>, vector<8x128xf32> -> vector<8x128xf32>
      %65 = vector.broadcast %61 : vector<1x128xf32> to vector<8x128xf32>
      %66 = arith.addf %64, %65 : vector<8x128xf32>
      %c0_37 = arith.constant 0 : index
      %c0_38 = arith.constant 0 : index
      %67 = vector.load %arg7[%c0_37, %c0_38] : memref<8x128xf32, #tpu.memory_space<vmem>>, vector<8x128xf32>
      tpu.vector_store %arg7[%c0_37, %c0_38], %66 {strides = array<i32>} : memref<8x128xf32, #tpu.memory_space<vmem>>, vector<8x128xf32>,
      %c0_39 = arith.constant 0 : index
      %c0_40 = arith.constant 0 : index
      %68 = vector.load %arg6[%c0_39, %c0_40] : memref<8x128xf32, #tpu.memory_space<vmem>>, vector<8x128xf32>
      %69 = tpu.iota {dimensions = array<i32: 1>} : vector<8x128xi32>
      %c9_i32 = arith.constant 9 : i32
      %70 = vector.broadcast %c9_i32 : i32 to vector<8x128xi32>
      %71 = arith.cmpi slt, %69, %70 : vector<8x128xi32>
      %72 = arith.extui %71 : vector<8x128xi1> to vector<8x128xi32>
      %73 = arith.sitofp %72 : vector<8x128xi32> to vector<8x128xf32>
      %c9_i32_41 = arith.constant 9 : i32
      %74 = vector.broadcast %c9_i32_41 : i32 to vector<8x128xi32>
      %75 = arith.cmpi sge, %69, %74 : vector<8x128xi32>
      %c12_i32 = arith.constant 12 : i32
      %76 = vector.broadcast %c12_i32 : i32 to vector<8x128xi32>
      %77 = arith.cmpi slt, %69, %76 : vector<8x128xi32>
      %78 = arith.andi %75, %77 : vector<8x128xi1>
      %79 = arith.extui %78 : vector<8x128xi1> to vector<8x128xi32>
      %80 = arith.sitofp %79 : vector<8x128xi32> to vector<8x128xf32>
      %cst_42 = arith.constant 0.000000e+00 : f32
      %81 = vector.broadcast %cst_42 : f32 to vector<8x128xf32>
      %82 = arith.cmpf ogt, %73, %81 : vector<8x128xf32>
      %cst_43 = arith.constant -1.000000e+30 : f32
      %83 = vector.broadcast %cst_43 : f32 to vector<8x128xf32>
      %84 = arith.select %82, %66, %83 : vector<8x128xi1>, vector<8x128xf32>
      %cst_44 = arith.constant dense<0xFF800000> : vector<8xf32>
      %85 = vector.multi_reduction <maximumf>, %84, %cst_44 [1] : vector<8x128xf32> to vector<8xf32>
      %86 = vector.shape_cast %85 : vector<8xf32> to vector<8x1xf32>
      %87 = vector.broadcast %86 : vector<8x1xf32> to vector<8x128xf32>
      %88 = arith.subf %84, %87 : vector<8x128xf32>
      %89 = math.exp %88 : vector<8x128xf32>
      %90 = arith.mulf %89, %73 : vector<8x128xf32>
      %cst_45 = arith.constant dense<0.000000e+00> : vector<8xf32>
      %91 = vector.multi_reduction <add>, %90, %cst_45 [1] : vector<8x128xf32> to vector<8xf32>
      %92 = vector.shape_cast %91 : vector<8xf32> to vector<8x1xf32>
      %93 = tpu.reciprocal %92 {approx = true} : vector<8x1xf32> -> vector<8x1xf32>
      %94 = arith.mulf %92, %93 : vector<8x1xf32>
      %cst_46 = arith.constant 2.000000e+00 : f32
      %95 = vector.broadcast %cst_46 : f32 to vector<8x1xf32>
      %96 = arith.subf %95, %94 : vector<8x1xf32>
      %97 = arith.mulf %93, %96 : vector<8x1xf32>
      %98 = vector.broadcast %97 : vector<8x1xf32> to vector<8x128xf32>
      %99 = arith.mulf %90, %98 : vector<8x128xf32>
      %100 = arith.mulf %99, %68 : vector<8x128xf32>
      %cst_47 = arith.constant dense<0.000000e+00> : vector<8xf32>
      %101 = vector.multi_reduction <add>, %100, %cst_47 [1] : vector<8x128xf32> to vector<8xf32>
      %102 = vector.shape_cast %101 : vector<8xf32> to vector<8x1xf32>
      %cst_48 = arith.constant 9.99999996E-13 : f32
      %103 = vector.broadcast %cst_48 : f32 to vector<8x1xf32>
      %104 = arith.maximumf %102, %103 : vector<8x1xf32>
      %105 = math.log %104 : vector<8x1xf32>
      %cst_49 = arith.constant 4.000000e-01 : f32
      %106 = vector.broadcast %cst_49 : f32 to vector<8x1xf32>
      %107 = arith.mulf %106, %105 : vector<8x1xf32>
      %108 = math.exp %107 : vector<8x1xf32>
      %cst_50 = arith.constant 1.000000e+00 : f32
      %109 = vector.broadcast %cst_50 : f32 to vector<8x1xf32>
      %110 = arith.subf %109, %108 : vector<8x1xf32>
      %cst_51 = arith.constant 4.000000e-01 : f32
      %111 = vector.broadcast %cst_51 : f32 to vector<8x1xf32>
      %112 = arith.divf %110, %111 : vector<8x1xf32>
      %113 = vector.broadcast %62 : vector<1x128xf32> to vector<8x128xf32>
      %114 = arith.mulf %113, %68 : vector<8x128xf32>
      %115 = arith.mulf %114, %73 : vector<8x128xf32>
      %cst_52 = arith.constant dense<0.000000e+00> : vector<8xf32>
      %116 = vector.multi_reduction <add>, %115, %cst_52 [1] : vector<8x128xf32> to vector<8xf32>
      %117 = vector.shape_cast %116 : vector<8xf32> to vector<8x1xf32>
      %cst_53 = arith.constant 0.000000e+00 : f32
      %118 = vector.broadcast %cst_53 : f32 to vector<8x1xf32>
      %119 = arith.mulf %118, %112 : vector<8x1xf32>
      %cst_54 = arith.constant 1.000000e+00 : f32
      %120 = vector.broadcast %cst_54 : f32 to vector<8x1xf32>
      %121 = arith.mulf %120, %112 : vector<8x1xf32>
      %122 = arith.mulf %121, %117 : vector<8x1xf32>
      %123 = arith.addf %119, %122 : vector<8x1xf32>
      %cst_55 = arith.constant 0.000000e+00 : f32
      %124 = vector.broadcast %cst_55 : f32 to vector<8x128xf32>
      %125 = arith.cmpf ogt, %80, %124 : vector<8x128xf32>
      %cst_56 = arith.constant -1.000000e+30 : f32
      %126 = vector.broadcast %cst_56 : f32 to vector<8x128xf32>
      %127 = arith.select %125, %66, %126 : vector<8x128xi1>, vector<8x128xf32>
      %cst_57 = arith.constant dense<0xFF800000> : vector<8xf32>
      %128 = vector.multi_reduction <maximumf>, %127, %cst_57 [1] : vector<8x128xf32> to vector<8xf32>
      %129 = vector.shape_cast %128 : vector<8xf32> to vector<8x1xf32>
      %130 = vector.broadcast %129 : vector<8x1xf32> to vector<8x128xf32>
      %131 = arith.subf %127, %130 : vector<8x128xf32>
      %132 = math.exp %131 : vector<8x128xf32>
      %133 = arith.mulf %132, %80 : vector<8x128xf32>
      %cst_58 = arith.constant dense<0.000000e+00> : vector<8xf32>
      %134 = vector.multi_reduction <add>, %133, %cst_58 [1] : vector<8x128xf32> to vector<8xf32>
      %135 = vector.shape_cast %134 : vector<8xf32> to vector<8x1xf32>
      %136 = tpu.reciprocal %135 {approx = true} : vector<8x1xf32> -> vector<8x1xf32>
      %137 = arith.mulf %135, %136 : vector<8x1xf32>
      %cst_59 = arith.constant 2.000000e+00 : f32
      %138 = vector.broadcast %cst_59 : f32 to vector<8x1xf32>
      %139 = arith.subf %138, %137 : vector<8x1xf32>
      %140 = arith.mulf %136, %139 : vector<8x1xf32>
      %141 = vector.broadcast %140 : vector<8x1xf32> to vector<8x128xf32>
      %142 = arith.mulf %133, %141 : vector<8x128xf32>
      %143 = arith.mulf %142, %68 : vector<8x128xf32>
      %cst_60 = arith.constant dense<0.000000e+00> : vector<8xf32>
      %144 = vector.multi_reduction <add>, %143, %cst_60 [1] : vector<8x128xf32> to vector<8xf32>
      %145 = vector.shape_cast %144 : vector<8xf32> to vector<8x1xf32>
      %cst_61 = arith.constant 9.99999996E-13 : f32
      %146 = vector.broadcast %cst_61 : f32 to vector<8x1xf32>
      %147 = arith.maximumf %145, %146 : vector<8x1xf32>
      %148 = math.log %147 : vector<8x1xf32>
      %cst_62 = arith.constant 4.000000e-01 : f32
      %149 = vector.broadcast %cst_62 : f32 to vector<8x1xf32>
      %150 = arith.mulf %149, %148 : vector<8x1xf32>
      %151 = math.exp %150 : vector<8x1xf32>
      %cst_63 = arith.constant 1.000000e+00 : f32
      %152 = vector.broadcast %cst_63 : f32 to vector<8x1xf32>
      %153 = arith.subf %152, %151 : vector<8x1xf32>
      %cst_64 = arith.constant 4.000000e-01 : f32
      %154 = vector.broadcast %cst_64 : f32 to vector<8x1xf32>
      %155 = arith.divf %153, %154 : vector<8x1xf32>
      %156 = vector.broadcast %62 : vector<1x128xf32> to vector<8x128xf32>
      %157 = arith.mulf %156, %68 : vector<8x128xf32>
      %158 = arith.mulf %157, %80 : vector<8x128xf32>
      %cst_65 = arith.constant dense<0.000000e+00> : vector<8xf32>
      %159 = vector.multi_reduction <add>, %158, %cst_65 [1] : vector<8x128xf32> to vector<8xf32>
      %160 = vector.shape_cast %159 : vector<8xf32> to vector<8x1xf32>
      %cst_66 = arith.constant 0.000000e+00 : f32
      %161 = vector.broadcast %cst_66 : f32 to vector<8x1xf32>
      %162 = arith.mulf %161, %155 : vector<8x1xf32>
      %cst_67 = arith.constant 1.000000e+00 : f32
      %163 = vector.broadcast %cst_67 : f32 to vector<8x1xf32>
      %164 = arith.mulf %163, %155 : vector<8x1xf32>
      %165 = arith.mulf %164, %160 : vector<8x1xf32>
      %166 = arith.addf %162, %165 : vector<8x1xf32>
      %c0_i32_68 = arith.constant 0 : i32
      %167 = vector.broadcast %c0_i32_68 : i32 to vector<8x128xi32>
      %168 = arith.cmpi eq, %69, %167 : vector<8x128xi32>
      %c1_i32_69 = arith.constant 1 : i32
      %169 = vector.broadcast %c1_i32_69 : i32 to vector<8x128xi32>
      %170 = arith.cmpi eq, %69, %169 : vector<8x128xi32>
      %cst_70 = arith.constant 0.000000e+00 : f32
      %171 = vector.shape_cast %166 : vector<8x1xf32> to vector<8x1xf32>
      %172 = vector.broadcast %171 : vector<8x1xf32> to vector<8x128xf32>
      %173 = vector.broadcast %cst_70 : f32 to vector<8x128xf32>
      %174 = arith.select %170, %172, %173 : vector<8x128xi1>, vector<8x128xf32>
      %175 = vector.shape_cast %123 : vector<8x1xf32> to vector<8x1xf32>
      %176 = vector.broadcast %175 : vector<8x1xf32> to vector<8x128xf32>
      %177 = arith.select %168, %176, %174 : vector<8x128xi1>, vector<8x128xf32>
      %c0_71 = arith.constant 0 : index
      %c0_72 = arith.constant 0 : index
      %178 = vector.load %arg8[%c0_71, %c0_72] : memref<8x128xf32, #tpu.memory_space<vmem>>, vector<8x128xf32>
      tpu.vector_store %arg8[%c0_71, %c0_72], %177 {strides = array<i32>} : memref<8x128xf32, #tpu.memory_space<vmem>>, vector<8x128xf32>,
    } else {
    }
    return
  }
  func.func @transform_0(%arg0: i32, %arg1: i32) -> (i32, i32, i32) {
    %c0_i32 = arith.constant 0 : i32
    %c0_i32_0 = arith.constant 0 : i32
    return %arg0, %arg1, %c0_i32 : i32, i32, i32
  }
  func.func @transform_1(%arg0: i32, %arg1: i32) -> (i32, i32, i32) {
    %c0_i32 = arith.constant 0 : i32
    %c0_i32_0 = arith.constant 0 : i32
    return %arg1, %arg0, %c0_i32 : i32, i32, i32
  }
  func.func @transform_2(%arg0: i32, %arg1: i32) -> (i32, i32) {
    %c0_i32 = arith.constant 0 : i32
    %c0_i32_0 = arith.constant 0 : i32
    %c0_i32_1 = arith.constant 0 : i32
    return %c0_i32, %c0_i32_0 : i32, i32
  }
  func.func @transform_3(%arg0: i32, %arg1: i32) -> (i32, i32) {
    %c0_i32 = arith.constant 0 : i32
    %c0_i32_0 = arith.constant 0 : i32
    %c0_i32_1 = arith.constant 0 : i32
    return %c0_i32, %c0_i32_0 : i32, i32
  }
  func.func @transform_4(%arg0: i32, %arg1: i32) -> (i32, i32) {
    %c0_i32 = arith.constant 0 : i32
    %c0_i32_0 = arith.constant 0 : i32
    return %arg0, %c0_i32 : i32, i32
  }
  func.func @transform_5(%arg0: i32, %arg1: i32) -> (i32, i32) {
    %c0_i32 = arith.constant 0 : i32
    %c0_i32_0 = arith.constant 0 : i32
    return %arg0, %c0_i32 : i32, i32
  }
  func.func @transform_6(%arg0: i32, %arg1: i32) -> (i32, i32) {
    %c0_i32 = arith.constant 0 : i32
    %c0_i32_0 = arith.constant 0 : i32
    return %arg0, %c0_i32 : i32, i32
  }
}

</mosaic_0001>

<llo_original>
// kernel: tpu_custom_call.1
$region0: #{tpu_custom_call.1}
  #allocation0 [shape = 'u32[]', space=smem, size = 0x4, offset = 0x4, fixed_abs, tag = 'smem constant byte address 0x4 - core index']
  #allocation1 [shape = 'u32[144,128]{1,0:T(1,128)}', space=vmem, size = 0x12000, scoped, tag = 'internal scratch']
  #allocation2 [shape = 'f32[8,768]{1,0:T(8,128)}', space=vmem, size = 0x6000, scoped, tag = 'scratch operand']
  #allocation3 [shape = 'f32[8,1]{1,0:T(8,128)}', space=vmem, size = 0x1000, scoped, tag = 'scratch operand']
  #allocation15 [shape = 's32[]', space=sflag, size = 0x4, offset = 0, fixed_abs, tag = 'sflag constant byte address 0x0 - dummy sync flag']
  %s0 = inlined_call_operand.hbm [shape: bf16[16,32,768], index: 0, kind: input, shape index: {}]
  %s1 = inlined_call_operand.hbm [shape: f32[2,16,128], index: 1, kind: input, shape index: {}]
  %s2 = inlined_call_operand.hbm [shape: f32[768,128], index: 2, kind: input, shape index: {}]
  %s3 = inlined_call_operand.vmem [shape: f32[8,128], index: 3, kind: input, shape index: {}]
  %s4 = inlined_call_operand.hbm [shape: f32[16,128], index: 4, kind: input, shape index: {}]
  %s5 = inlined_call_operand.hbm [shape: f32[16,128], index: 5, kind: output, shape index: {0}]
  %s6 = inlined_call_operand.hbm [shape: f32[16,128], index: 6, kind: output, shape index: {1}]
  %7 = xla_tuple %s5, %s6
  %s8 = sld [smem:[#allocation0]]
  $region85: #{tpu_custom_call.1} parent=0
    _
  %s10 = ssub.s32 1, %s8
  %s11 = scalar_select 0, %s10, %s8
  $region1: #{tpu_custom_call.1} parent=0
    #allocation4 [shape = 'u8[393216]{0}', space=vmem, size = 0x60000, scoped, tag = 'input window, operand 0']
    #allocation5 [shape = 's32[2]{0}', space=sflag, size = 0x8, scoped, tag = 'scoped memory for tpu_custom_call.1']
    #allocation6 [shape = 's32[2]{0}', space=sflag, size = 0x8, scoped, tag = 'scoped memory for tpu_custom_call.1']
    #allocation7 [shape = 'u8[8192]{0}', space=vmem, size = 0x2000, scoped, tag = 'input window, operand 1']
    #allocation8 [shape = 's32[2]{0}', space=sflag, size = 0x8, scoped, tag = 'scoped memory for tpu_custom_call.1']
    #allocation9 [shape = 'u8[393216]{0}', space=vmem, size = 0x60000, scoped, tag = 'input window, operand 2, single buffered']
    #allocation10 [shape = 'u8[8192]{0}', space=vmem, size = 0x2000, scoped, tag = 'input window, operand 4']
    #allocation11 [shape = 's32[2]{0}', space=sflag, size = 0x8, scoped, tag = 'scoped memory for tpu_custom_call.1']
    #allocation12 [shape = 'u8[8192]{0}', space=vmem, size = 0x2000, scoped, tag = 'output window, operand 0']
    #allocation13 [shape = 'u8[8192]{0}', space=vmem, size = 0x2000, scoped, tag = 'output window, operand 1']
    #allocation14 [shape = 's32[2]{0}', space=sflag, size = 0x8, scoped, tag = 'scoped memory for tpu_custom_call.1']
    %12 = vsyncpa [#allocation5], 0
    %s13 = scalar_lea.sflag [#allocation5], 1
    %14 = vsyncpa %s13, 0
    %15 = vsyncpa [#allocation8], 0
    %s16 = scalar_lea.sflag [#allocation8], 1
    %17 = vsyncpa %s16, 0
    %18 = vsyncpa [#allocation11], 0
    %s19 = scalar_lea.sflag [#allocation11], 1
    %20 = vsyncpa %s19, 0
    %21 = vsyncpa [#allocation6], 0
    %s22 = scalar_lea.sflag [#allocation6], 1
    %23 = vsyncpa %s22, 0
    %24 = vsyncpa [#allocation14], 0
    %s25 = scalar_lea.sflag [#allocation14], 1
    %26 = vsyncpa %s25, 0
    loop: start=0, step=1, limit=6
    $region2: #{tpu_custom_call.1} parent=1 // loop_pre_header
      _
    $region3: #{tpu_custom_call.1} parent=1 // loop_header
      %s28 = sphi 0, %s32
      %p29 = scmp.ge.s32.totalorder %s28, 6
      %s35 = sphi 0, %s47
      %s36 = sphi 0, %s43
      %s37 = sphi 0, %s35
      %s38 = sphi 0, %s36
      %s39 = sphi 0, %s37
      %s40 = sphi 0, %s38
      %s52 = sphi 0, %s54
      %s55 = sphi 0, %s52
      %s56 = sphi 0, %s55
      %s72 = sphi 0, %s56
      %s80 = sphi 0, %s82
      %s83 = sphi 0, %s80
      %s84 = sphi 0, %s83
      %s100 = sphi 0, %s84
      %s104 = sphi 0, %s104
      %s106 = sphi 0, %s104
      %s107 = sphi 0, %s106
      %s121 = sphi 0, %s107
      %s125 = sphi 0, %s125
      %s127 = sphi 0, %s125
      %s128 = sphi 0, %s127
      %s142 = sphi 0, %s128
      %s148 = sphi 0, %s150
      %s151 = sphi 0, %s148
      %s152 = sphi 0, %s151
      %s168 = sphi 0, %s152
      %s174 = sphi 0, %s176
      %s177 = sphi 0, %s174
      %s178 = sphi 0, %s177
      %s194 = sphi 0, %s178
      %s200 = sphi 0, %s202
      %s203 = sphi 0, %s200
      %s204 = sphi 0, %s203
      %s220 = sphi 0, %s204
    $region4: #{tpu_custom_call.1} parent=1 // loop_header_branch
      %31 = sbr.rel (%p29) target = $region8
    $region5: #{tpu_custom_call.1} parent=1 // loop_body
      %s33 = ssub.s32 %s28, 1
      %s34 = ssub.s32 %s28, 2
      %s41 = sadd.s32 1, %s36
      %p42 = scmp.ge.s32.totalorder %s41, 2
      %s43 = scalar_select %p42, 0, %s41
      %s44 = sadd.s32 1, %s35
      %s45 = scalar_select %p42, %s44, %s35
      %p46 = scmp.ge.s32.totalorder %s45, 2
      %s47 = scalar_select %p46, 0, %s45
      %s48 = ssub.s32 %s35, %s47
      %s49 = ssub.s32 %s36, %s43
      %s50 = sor.u32 %s48, %s49
      %p51 = scmp.eq.s32.totalorder %s50, 0
      %s53 = sadd.s32 %s52, 1
      %s54 = scalar_select %p51, %s52, %s53
      %p57 = pneg %p51
      %p58 = scmp.eq.s32.totalorder %s28, 3
      %p59 = por %p57, %p58
      %p60 = scmp.ne.s32.totalorder %s52, %s55
      %p61 = scmp.eq.s32.totalorder %s28, 0
      %p62 = por %p60, %p61
      %p63 = scmp.ne.s32.totalorder %s52, %s55
      %p64 = scmp.eq.s32.totalorder %s33, 3
      %p65 = por %p63, %p64
      %p66 = scmp.ne.s32.totalorder %s55, %s56
      %p67 = scmp.eq.s32.totalorder %s33, 0
      %p68 = por %p66, %p67
      %p69 = scmp.ne.s32.totalorder %s55, %s56
      %p70 = scmp.eq.s32.totalorder %s34, 3
      %p71 = por %p69, %p70
      %p73 = scmp.ne.s32.totalorder %s56, %s72
      %p74 = scmp.eq.s32.totalorder %s34, 0
      %p75 = por %p73, %p74
      %s76 = ssub.s32 %s36, %s43
      %s77 = ssub.s32 %s35, %s47
      %s78 = sor.u32 %s76, %s77
      %p79 = scmp.eq.s32.totalorder %s78, 0
      %s81 = sadd.s32 %s80, 1
      %s82 = scalar_select %p79, %s80, %s81
      %p85 = pneg %p79
      %p86 = scmp.eq.s32.totalorder %s28, 3
      %p87 = por %p85, %p86
      %p88 = scmp.ne.s32.totalorder %s80, %s83
      %p89 = scmp.eq.s32.totalorder %s28, 0
      %p90 = por %p88, %p89
      %p91 = scmp.ne.s32.totalorder %s80, %s83
      %p92 = scmp.eq.s32.totalorder %s33, 3
      %p93 = por %p91, %p92
      %p94 = scmp.ne.s32.totalorder %s83, %s84
      %p95 = scmp.eq.s32.totalorder %s33, 0
      %p96 = por %p94, %p95
      %p97 = scmp.ne.s32.totalorder %s83, %s84
      %p98 = scmp.eq.s32.totalorder %s34, 3
      %p99 = por %p97, %p98
      %p101 = scmp.ne.s32.totalorder %s84, %s100
      %p102 = scmp.eq.s32.totalorder %s34, 0
      %p103 = por %p101, %p102
      %s105 = sadd.s32 %s104, 1
      %p108 = scmp.eq.s32.totalorder %s28, 3
      %p109 = scmp.ne.s32.totalorder %s104, %s106
      %p110 = scmp.eq.s32.totalorder %s28, 0
      %p111 = por %p109, %p110
      %p112 = scmp.ne.s32.totalorder %s104, %s106
      %p113 = scmp.eq.s32.totalorder %s33, 3
      %p114 = por %p112, %p113
      %p115 = scmp.ne.s32.totalorder %s106, %s107
      %p116 = scmp.eq.s32.totalorder %s33, 0
      %p117 = por %p115, %p116
      %p118 = scmp.ne.s32.totalorder %s106, %s107
      %p119 = scmp.eq.s32.totalorder %s34, 3
      %p120 = por %p118, %p119
      %p122 = scmp.ne.s32.totalorder %s107, %s121
      %p123 = scmp.eq.s32.totalorder %s34, 0
      %p124 = por %p122, %p123
      %s126 = sadd.s32 %s125, 1
      %p129 = scmp.eq.s32.totalorder %s28, 3
      %p130 = scmp.ne.s32.totalorder %s125, %s127
      %p131 = scmp.eq.s32.totalorder %s28, 0
      %p132 = por %p130, %p131
      %p133 = scmp.ne.s32.totalorder %s125, %s127
      %p134 = scmp.eq.s32.totalorder %s33, 3
      %p135 = por %p133, %p134
      %p136 = scmp.ne.s32.totalorder %s127, %s128
      %p137 = scmp.eq.s32.totalorder %s33, 0
      %p138 = por %p136, %p137
      %p139 = scmp.ne.s32.totalorder %s127, %s128
      %p140 = scmp.eq.s32.totalorder %s34, 3
      %p141 = por %p139, %p140
      %p143 = scmp.ne.s32.totalorder %s128, %s142
      %p144 = scmp.eq.s32.totalorder %s34, 0
      %p145 = por %p143, %p144
      %s146 = ssub.s32 %s35, %s47
      %p147 = scmp.eq.s32.totalorder %s146, 0
      %s149 = sadd.s32 %s148, 1
      %s150 = scalar_select %p147, %s148, %s149
      %p153 = pneg %p147
      %p154 = scmp.eq.s32.totalorder %s28, 3
      %p155 = por %p153, %p154
      %p156 = scmp.ne.s32.totalorder %s148, %s151
      %p157 = scmp.eq.s32.totalorder %s28, 0
      %p158 = por %p156, %p157
      %p159 = scmp.ne.s32.totalorder %s148, %s151
      %p160 = scmp.eq.s32.totalorder %s33, 3
      %p161 = por %p159, %p160
      %p162 = scmp.ne.s32.totalorder %s151, %s152
      %p163 = scmp.eq.s32.totalorder %s33, 0
      %p164 = por %p162, %p163
      %p165 = scmp.ne.s32.totalorder %s151, %s152
      %p166 = scmp.eq.s32.totalorder %s34, 3
      %p167 = por %p165, %p166
      %p169 = scmp.ne.s32.totalorder %s152, %s168
      %p170 = scmp.eq.s32.totalorder %s34, 0
      %p171 = por %p169, %p170
      %s172 = ssub.s32 %s35, %s47
      %p173 = scmp.eq.s32.totalorder %s172, 0
      %s175 = sadd.s32 %s174, 1
      %s176 = scalar_select %p173, %s174, %s175
      %p179 = pneg %p173
      %p180 = scmp.eq.s32.totalorder %s28, 3
      %p181 = por %p179, %p180
      %p182 = scmp.ne.s32.totalorder %s174, %s177
      %p183 = scmp.eq.s32.totalorder %s28, 0
      %p184 = por %p182, %p183
      %p185 = scmp.ne.s32.totalorder %s174, %s177
      %p186 = scmp.eq.s32.totalorder %s33, 3
      %p187 = por %p185, %p186
      %p188 = scmp.ne.s32.totalorder %s177, %s178
      %p189 = scmp.eq.s32.totalorder %s33, 0
      %p190 = por %p188, %p189
      %p191 = scmp.ne.s32.totalorder %s177, %s178
      %p192 = scmp.eq.s32.totalorder %s34, 3
      %p193 = por %p191, %p192
      %p195 = scmp.ne.s32.totalorder %s178, %s194
      %p196 = scmp.eq.s32.totalorder %s34, 0
      %p197 = por %p195, %p196
      %s198 = ssub.s32 %s35, %s47
      %p199 = scmp.eq.s32.totalorder %s198, 0
      %s201 = sadd.s32 %s200, 1
      %s202 = scalar_select %p199, %s200, %s201
      %p205 = pneg %p199
      %p206 = scmp.eq.s32.totalorder %s28, 3
      %p207 = por %p205, %p206
      %p208 = scmp.ne.s32.totalorder %s200, %s203
      %p209 = scmp.eq.s32.totalorder %s28, 0
      %p210 = por %p208, %p209
      %p211 = scmp.ne.s32.totalorder %s200, %s203
      %p212 = scmp.eq.s32.totalorder %s33, 3
      %p213 = por %p211, %p212
      %p214 = scmp.ne.s32.totalorder %s203, %s204
      %p215 = scmp.eq.s32.totalorder %s33, 0
      %p216 = por %p214, %p215
      %p217 = scmp.ne.s32.totalorder %s203, %s204
      %p218 = scmp.eq.s32.totalorder %s34, 3
      %p219 = por %p217, %p218
      %p221 = scmp.ne.s32.totalorder %s204, %s220
      %p222 = scmp.eq.s32.totalorder %s34, 0
      %p223 = por %p221, %p222
      %p224 = scmp.le.s32.totalorder 1, %s28
      %p225 = scmp.lt.s32.totalorder %s28, 5
      %p226 = pnand %p224, %p225
      %p227 = pneg %p226
      // Predicated region
      $region9: #{tpu_custom_call.1} parent=5 // pred_check
        _
      $region10: #{tpu_custom_call.1} parent=5 // pred_check_branch
        %229 = sbr.rel (%p226) target = $region12
      $region11: #{tpu_custom_call.1} parent=5 // pred_region
        %s230 = ssub.s32 %s28, 1
        // Predicated region
        $region13: #{tpu_custom_call.1} parent=11 // pred_check
          %p231 = pneg %p117
        $region14: #{tpu_custom_call.1} parent=11 // pred_check_branch
          %233 = sbr.rel (%p231) target = $region16
        $region15: #{tpu_custom_call.1} parent=11 // pred_region
          %s235 = ssub.s32 12288, 12288
          %236 = vsyncadd [#allocation8], %s235
          %s237 = sshll.u32 [#allocation9], 4
          %s238 = int_to_ptr.vmem [resolvable:$true] %s237
          %243 = dma.hbm_to_vmem [thread:$0]  %s2, 12288, %s238, [#allocation8], 128, 128, 8
        $region16: #{tpu_custom_call.1} parent=11 // pred_fallthru
          _
        // Predicated region
        $region17: #{tpu_custom_call.1} parent=11 // pred_check
          %p244 = pneg %p138
        $region18: #{tpu_custom_call.1} parent=11 // pred_check_branch
          %246 = sbr.rel (%p244) target = $region20
        $region19: #{tpu_custom_call.1} parent=11 // pred_region
          _
        $region20: #{tpu_custom_call.1} parent=11 // pred_fallthru
          _
      $region12: #{tpu_custom_call.1} parent=5 // pred_fallthru
        _
      %p247 = scmp.lt.s32.totalorder %s28, 4
      // Predicated region
      $region21: #{tpu_custom_call.1} parent=5 // pred_check
        %p248 = pneg %p247
      $region22: #{tpu_custom_call.1} parent=5 // pred_check_branch
        %250 = sbr.rel (%p248) target = $region24
      $region23: #{tpu_custom_call.1} parent=5 // pred_region
        // Predicated region
        $region25: #{tpu_custom_call.1} parent=23 // pred_check
          %p251 = pneg %p62
        $region26: #{tpu_custom_call.1} parent=23 // pred_check_branch
          %253 = sbr.rel (%p251) target = $region28
        $region27: #{tpu_custom_call.1} parent=23 // pred_region
          #allocation16 [shape = 'u32[6]{0}', space=smem, size = 0x18, scoped, tag = 'DMA stride descriptor']
          %s254 = sand.u32 %s52, 1
          %s255 = scalar_lea.sflag [#allocation5], %s254
          %s256 = sand.u32 %s52, 1
          %s257 = smul.addr %s256, 384
          %s258 = scalar_lea.vmem [#allocation4], %s257
          %s259 = smul.u32 8, %s35
          %s260 = smul.u32 2, %s36
          %s262 = ssub.s32 6144, 6144
          %263 = vsyncadd %s255, %s262
          %s264 = smul.addr %s260, 6
          %s265 = smul.addr %s259, 24
          %s266 = sadd.s32 %s264, %s265
          %s267 = smul.addr %s266, 64
          %s268 = scalar_lea.hbm %s0, %s267
          %s270 = sshll.u32 1, 14
          %s271 = sxor.u32 4294967295, %s270
          %s273 = sld [smem:[#allocation0]]
          %s274 = sadd.s32 2, %s273
          %s276 = sshll.u32 7, 26
          %s277 = sxor.u32 4294967295, %s276
          %s278 = sand.u32 0, %s277
          %s279 = sshll.u32 %s274, 26
          %s280 = sor.u32 %s278, %s279
          %s281 = sshll.u32 %s258, 4
          %s282 = int_to_ptr.vmem [resolvable:$true] %s281
          %288 = sst [smem:[#allocation16]] 1536
          %s289 = scalar_lea.smem [#allocation16], 1
          %290 = sst [smem:[%s289]] 768
          %s291 = scalar_lea.smem [#allocation16], 2
          %292 = sst [smem:[%s291]] 2
          %s293 = scalar_lea.smem [#allocation16], 3
          %294 = sst [smem:[%s293]] 384
          %s295 = scalar_lea.smem [#allocation16], 4
          %296 = sst [smem:[%s295]] 384
          %s297 = scalar_lea.smem [#allocation16], 5
          %298 = sst [smem:[%s297]] 24
          %300 = dma.general %s268, 6144, %s282, %s255, [#allocation15], [#allocation16], %s280, 0
        $region28: #{tpu_custom_call.1} parent=23 // pred_fallthru
          _
        // Predicated region
        $region29: #{tpu_custom_call.1} parent=23 // pred_check
          %p301 = pneg %p90
        $region30: #{tpu_custom_call.1} parent=23 // pred_check_branch
          %303 = sbr.rel (%p301) target = $region32
        $region31: #{tpu_custom_call.1} parent=23 // pred_region
          %s304 = sand.u32 %s28, 1
          %s305 = scalar_lea.sflag [#allocation8], %s304
          %s306 = sand.u32 %s80, 1
          %s307 = smul.addr %s306, 8
          %s308 = scalar_lea.vmem [#allocation7], %s307
          %s310 = ssub.s32 128, 128
          %311 = vsyncadd %s305, %s310
          %s312 = smul.addr %s36, 2
          %s313 = sadd.s32 %s35, %s312
          %s314 = smul.addr %s313, 128
          %s315 = scalar_lea.hbm %s1, %s314
          %s317 = sshll.u32 %s308, 4
          %s318 = int_to_ptr.vmem [resolvable:$true] %s317
          %320 = dma.hbm_to_vmem [thread:$0]  %s315, 128, %s318, %s305
        $region32: #{tpu_custom_call.1} parent=23 // pred_fallthru
          _
        // Predicated region
        $region33: #{tpu_custom_call.1} parent=23 // pred_check
          %p321 = pneg %p158
        $region34: #{tpu_custom_call.1} parent=23 // pred_check_branch
          %323 = sbr.rel (%p321) target = $region36
        $region35: #{tpu_custom_call.1} parent=23 // pred_region
          %s324 = sand.u32 %s148, 1
          %s325 = scalar_lea.sflag [#allocation11], %s324
          %s326 = sand.u32 %s148, 1
          %s327 = smul.addr %s326, 8
          %s328 = scalar_lea.vmem [#allocation10], %s327
          %s330 = ssub.s32 128, 128
          %331 = vsyncadd %s325, %s330
          %s332 = smul.addr %s35, 128
          %s333 = scalar_lea.hbm %s4, %s332
          %s335 = sshll.u32 %s328, 4
          %s336 = int_to_ptr.vmem [resolvable:$true] %s335
          %338 = dma.hbm_to_vmem [thread:$0]  %s333, 128, %s336, %s325
        $region36: #{tpu_custom_call.1} parent=23 // pred_fallthru
          _
      $region24: #{tpu_custom_call.1} parent=5 // pred_fallthru
        _
      %p339 = scmp.le.s32.totalorder 1, %s28
      %p340 = scmp.lt.s32.totalorder %s28, 5
      %p341 = pnand %p339, %p340
      %p342 = pneg %p341
      // Predicated region
      $region37: #{tpu_custom_call.1} parent=5 // pred_check
        _
      $region38: #{tpu_custom_call.1} parent=5 // pred_check_branch
        %344 = sbr.rel (%p341) target = $region40
      $region39: #{tpu_custom_call.1} parent=5 // pred_region
        %s345 = ssub.s32 %s28, 1
        %s346 = sand.u32 %s55, 1
        %s347 = scalar_lea.sflag [#allocation5], %s346
        %s348 = sand.u32 %s55, 1
        %s349 = smul.addr %s348, 384
        %s350 = scalar_lea.vmem [#allocation4], %s349
        // Predicated region
        $region41: #{tpu_custom_call.1} parent=39 // pred_check
          %p351 = pneg %p68
        $region42: #{tpu_custom_call.1} parent=39 // pred_check_branch
          %353 = sbr.rel (%p351) target = $region44
        $region43: #{tpu_custom_call.1} parent=39 // pred_region
          %354 = dma.done %s347, 6144
        $region44: #{tpu_custom_call.1} parent=39 // pred_fallthru
          _
        %s355 = sand.u32 %s33, 1
        %s356 = scalar_lea.sflag [#allocation8], %s355
        %s357 = sand.u32 %s83, 1
        %s358 = smul.addr %s357, 8
        %s359 = scalar_lea.vmem [#allocation7], %s358
        // Predicated region
        $region45: #{tpu_custom_call.1} parent=39 // pred_check
          %p360 = pneg %p96
        $region46: #{tpu_custom_call.1} parent=39 // pred_check_branch
          %362 = sbr.rel (%p360) target = $region48
        $region47: #{tpu_custom_call.1} parent=39 // pred_region
          %363 = dma.done %s356, 128
        $region48: #{tpu_custom_call.1} parent=39 // pred_fallthru
          _
        // Predicated region
        $region49: #{tpu_custom_call.1} parent=39 // pred_check
          %p364 = pneg %p117
        $region50: #{tpu_custom_call.1} parent=39 // pred_check_branch
          %366 = sbr.rel (%p364) target = $region52
        $region51: #{tpu_custom_call.1} parent=39 // pred_region
          %367 = dma.done [#allocation8], 12288
        $region52: #{tpu_custom_call.1} parent=39 // pred_fallthru
          _
        %s368 = sand.u32 %s151, 1
        %s369 = scalar_lea.sflag [#allocation11], %s368
        %s370 = sand.u32 %s151, 1
        %s371 = smul.addr %s370, 8
        %s372 = scalar_lea.vmem [#allocation10], %s371
        // Predicated region
        $region53: #{tpu_custom_call.1} parent=39 // pred_check
          %p373 = pneg %p164
        $region54: #{tpu_custom_call.1} parent=39 // pred_check_branch
          %375 = sbr.rel (%p373) target = $region56
        $region55: #{tpu_custom_call.1} parent=39 // pred_region
          %376 = dma.done %s369, 128
        $region56: #{tpu_custom_call.1} parent=39 // pred_fallthru
          _
        %s377 = sand.u32 %s55, 1
        %s378 = scalar_lea.sflag [#allocation5], %s377
        %s379 = sand.u32 %s55, 1
        %s380 = smul.addr %s379, 384
        %s381 = scalar_lea.vmem [#allocation4], %s380
        %p382 = pneg %p68
        %p383 = pneg %p65
        %s384 = sand.u32 %s33, 1
        %s385 = scalar_lea.sflag [#allocation8], %s384
        %s386 = sand.u32 %s83, 1
        %s387 = smul.addr %s386, 8
        %s388 = scalar_lea.vmem [#allocation7], %s387
        %p389 = pneg %p96
        %p390 = pneg %p93
        %p391 = pneg %p117
        %p392 = pneg %p114
        %p393 = pneg %p138
        %p394 = pneg %p135
        %s395 = sand.u32 %s151, 1
        %s396 = scalar_lea.sflag [#allocation11], %s395
        %s397 = sand.u32 %s151, 1
        %s398 = smul.addr %s397, 8
        %s399 = scalar_lea.vmem [#allocation10], %s398
        %p400 = pneg %p164
        %p401 = pneg %p161
        %p402 = pneg %p190
        %p403 = pneg %p187
        %s404 = sand.u32 %s177, 1
        %s405 = scalar_lea.sflag [#allocation6], %s404
        %s406 = sand.u32 %s177, 1
        %s407 = smul.addr %s406, 8
        %s408 = scalar_lea.vmem [#allocation12], %s407
        %p409 = pneg %p216
        %p410 = pneg %p213
        %s411 = sand.u32 %s203, 1
        %s412 = scalar_lea.sflag [#allocation14], %s411
        %s413 = sand.u32 %s203, 1
        %s414 = smul.addr %s413, 8
        %s415 = scalar_lea.vmem [#allocation13], %s414
        %s416 = smul.u32 8, %s37
        %s417 = smul.u32 2, %s38
        %p419 = scmp.eq.s32.totalorder %s38, 0
        // Predicated region
        $region57: #{tpu_custom_call.1} parent=39 // pred_check
          %p420 = pneg %p419
        $region58: #{tpu_custom_call.1} parent=39 // pred_check_branch
          %422 = sbr.rel (%p420) target = $region60
        $region59: #{tpu_custom_call.1} parent=39 // pred_region
          %423 = vst [vmem:[#allocation2] sm:$0xff] 0.0
          %424 = vst [vmem:[#allocation2 + $0x8] sm:$0xff] 0.0
          %425 = vst [vmem:[#allocation2 + $0x10] sm:$0xff] 0.0
          %426 = vst [vmem:[#allocation2 + $0x18] sm:$0xff] 0.0
          %427 = vst [vmem:[#allocation2 + $0x20] sm:$0xff] 0.0
          %428 = vst [vmem:[#allocation2 + $0x28] sm:$0xff] 0.0
          %vm429 = vcmask 7168
          %430 = vst.msk [vmem:[#allocation3] sm:$0xff] %vm429, 0.0
        $region60: #{tpu_custom_call.1} parent=39 // pred_fallthru
          _
        %v431 = vld [vmem:[%s350] sm:$0xff]
        %v432 = vld [vmem:[%s350 + $0x8] sm:$0xff]
        %v433 = vld [vmem:[%s350 + $0x10] sm:$0xff]
        %v434 = vld [vmem:[%s350 + $0x18] sm:$0xff]
        %v435 = vld [vmem:[%s350 + $0x20] sm:$0xff]
        %v436 = vld [vmem:[%s350 + $0x28] sm:$0xff]
        %v437 = vld [vmem:[%s350 + $0x30] sm:$0xff]
        %v438 = vld [vmem:[%s350 + $0x38] sm:$0xff]
        %v439 = vld [vmem:[%s350 + $0x40] sm:$0xff]
        %v440 = vld [vmem:[%s350 + $0x48] sm:$0xff]
        %v441 = vld [vmem:[%s350 + $0x50] sm:$0xff]
        %v442 = vld [vmem:[%s350 + $0x58] sm:$0xff]
        %v443 = vld [vmem:[%s350 + $0x60] sm:$0xff]
        %v444 = vld [vmem:[%s350 + $0x68] sm:$0xff]
        %v445 = vld [vmem:[%s350 + $0x70] sm:$0xff]
        %v446 = vld [vmem:[%s350 + $0x78] sm:$0xff]
        %v447 = vld [vmem:[%s350 + $0x80] sm:$0xff]
        %v448 = vld [vmem:[%s350 + $0x88] sm:$0xff]
        %v449 = vld [vmem:[%s350 + $0x90] sm:$0xff]
        %v450 = vld [vmem:[%s350 + $0x98] sm:$0xff]
        %v451 = vld [vmem:[%s350 + $0xa0] sm:$0xff]
        %v452 = vld [vmem:[%s350 + $0xa8] sm:$0xff]
        %v453 = vld [vmem:[%s350 + $0xb0] sm:$0xff]
        %v454 = vld [vmem:[%s350 + $0xb8] sm:$0xff]
        %v455 = vld [vmem:[%s350 + $0xc0] sm:$0xff]
        %v456 = vld [vmem:[%s350 + $0xc8] sm:$0xff]
        %v457 = vld [vmem:[%s350 + $0xd0] sm:$0xff]
        %v458 = vld [vmem:[%s350 + $0xd8] sm:$0xff]
        %v459 = vld [vmem:[%s350 + $0xe0] sm:$0xff]
        %v460 = vld [vmem:[%s350 + $0xe8] sm:$0xff]
        %v461 = vld [vmem:[%s350 + $0xf0] sm:$0xff]
        %v462 = vld [vmem:[%s350 + $0xf8] sm:$0xff]
        %v463 = vld [vmem:[%s350 + $0x100] sm:$0xff]
        %v464 = vld [vmem:[%s350 + $0x108] sm:$0xff]
        %v465 = vld [vmem:[%s350 + $0x110] sm:$0xff]
        %v466 = vld [vmem:[%s350 + $0x118] sm:$0xff]
        %v467 = vld [vmem:[%s350 + $0x120] sm:$0xff]
        %v468 = vld [vmem:[%s350 + $0x128] sm:$0xff]
        %v469 = vld [vmem:[%s350 + $0x130] sm:$0xff]
        %v470 = vld [vmem:[%s350 + $0x138] sm:$0xff]
        %v471 = vld [vmem:[%s350 + $0x140] sm:$0xff]
        %v472 = vld [vmem:[%s350 + $0x148] sm:$0xff]
        %v473 = vld [vmem:[%s350 + $0x150] sm:$0xff]
        %v474 = vld [vmem:[%s350 + $0x158] sm:$0xff]
        %v475 = vld [vmem:[%s350 + $0x160] sm:$0xff]
        %v476 = vld [vmem:[%s350 + $0x168] sm:$0xff]
        %v477 = vld [vmem:[%s350 + $0x170] sm:$0xff]
        %v478 = vld [vmem:[%s350 + $0x178] sm:$0xff]
        %v479 = vld [vmem:[%s359] sm:$0xff]
        %v480 = vlaneseq
        %v481 = vshrl.u32 %v480, 7
        %vm482 = vcmp.eq.s32.totalorder %v481, 0
        %v483 = vsel %vm482, %v479, 0.0
        %vm484 = vcmp.eq.s32.totalorder %v481, 1
        %v485 = vsel %vm484, %v479, 0.0
        %vm486 = vcmp.eq.s32.totalorder %v481, 2
        %v487 = vsel %vm486, %v479, 0.0
        %vm488 = vcmp.eq.s32.totalorder %v481, 3
        %v489 = vsel %vm488, %v479, 0.0
        %vm490 = vcmp.eq.s32.totalorder %v481, 4
        %v491 = vsel %vm490, %v479, 0.0
        %vm492 = vcmp.eq.s32.totalorder %v481, 5
        %v493 = vsel %vm492, %v479, 0.0
        %vm494 = vcmp.eq.s32.totalorder %v481, 6
        %v495 = vsel %vm494, %v479, 0.0
        %vm496 = vcmp.eq.s32.totalorder %v481, 7
        %v497 = vsel %vm496, %v479, 0.0
        %499 = vrot.lane.b32.xlu0 %v485, 16
        %v500 = vpop.permute.xlu0 %499
        %503 = vrot.lane.b32.xlu0 %v487, 32
        %v504 = vpop.permute.xlu0 %503
        %507 = vrot.lane.b32.xlu0 %v489, 48
        %v508 = vpop.permute.xlu0 %507
        %511 = vrot.lane.b32.xlu0 %v491, 64
        %v512 = vpop.permute.xlu0 %511
        %515 = vrot.lane.b32.xlu0 %v493, 80
        %v516 = vpop.permute.xlu0 %515
        %519 = vrot.lane.b32.xlu0 %v495, 96
        %v520 = vpop.permute.xlu0 %519
        %523 = vrot.lane.b32.xlu0 %v497, 112
        %v524 = vpop.permute.xlu0 %523
        %vm526 = vcmask 130048
        %v527 = vsel %vm526, %v483, %v500
        %vm528 = vcmask 261120
        %v529 = vsel %vm528, %v527, %v504
        %vm530 = vcmask 392192
        %v531 = vsel %vm530, %v529, %v508
        %vm532 = vcmask 523264
        %v533 = vsel %vm532, %v531, %v512
        %vm534 = vcmask 654336
        %v535 = vsel %vm534, %v533, %v516
        %vm536 = vcmask 785408
        %v537 = vsel %vm536, %v535, %v520
        %vm538 = vcmask 916480
        %v539 = vsel %vm538, %v537, %v524
        %v540 = vpack.c.bf16 %v539, %v539
        %v541 = vld [vmem:[#allocation2] sm:$0xff]
        %v542 = vld [vmem:[#allocation2 + $0x8] sm:$0xff]
        %v543 = vld [vmem:[#allocation2 + $0x10] sm:$0xff]
        %v544 = vld [vmem:[#allocation2 + $0x18] sm:$0xff]
        %v545 = vld [vmem:[#allocation2 + $0x20] sm:$0xff]
        %v546 = vld [vmem:[#allocation2 + $0x28] sm:$0xff]
        %v595 = vunpack.c.l.b16 %v431
        %v596 = vunpack.c.h.b16 %v431
        %v597 = vunpack.c.l.b16 %v432
        %v598 = vunpack.c.h.b16 %v432
        %v599 = vunpack.c.l.b16 %v433
        %v600 = vunpack.c.h.b16 %v433
        %v601 = vunpack.c.l.b16 %v434
        %v602 = vunpack.c.h.b16 %v434
        %v603 = vunpack.c.l.b16 %v435
        %v604 = vunpack.c.h.b16 %v435
        %v605 = vunpack.c.l.b16 %v436
        %v606 = vunpack.c.h.b16 %v436
        %v607 = vunpack.c.l.b16 %v437
        %v608 = vunpack.c.h.b16 %v437
        %v609 = vunpack.c.l.b16 %v438
        %v610 = vunpack.c.h.b16 %v438
        %v611 = vunpack.c.l.b16 %v439
        %v612 = vunpack.c.h.b16 %v439
        %v613 = vunpack.c.l.b16 %v440
        %v614 = vunpack.c.h.b16 %v440
        %v615 = vunpack.c.l.b16 %v441
        %v616 = vunpack.c.h.b16 %v441
        %v617 = vunpack.c.l.b16 %v442
        %v618 = vunpack.c.h.b16 %v442
        %v619 = vunpack.c.l.b16 %v443
        %v620 = vunpack.c.h.b16 %v443
        %v621 = vunpack.c.l.b16 %v444
        %v622 = vunpack.c.h.b16 %v444
        %v623 = vunpack.c.l.b16 %v445
        %v624 = vunpack.c.h.b16 %v445
        %v625 = vunpack.c.l.b16 %v446
        %v626 = vunpack.c.h.b16 %v446
        %v627 = vunpack.c.l.b16 %v447
        %v628 = vunpack.c.h.b16 %v447
        %v629 = vunpack.c.l.b16 %v448
        %v630 = vunpack.c.h.b16 %v448
        %v631 = vunpack.c.l.b16 %v449
        %v632 = vunpack.c.h.b16 %v449
        %v633 = vunpack.c.l.b16 %v450
        %v634 = vunpack.c.h.b16 %v450
        %v635 = vunpack.c.l.b16 %v451
        %v636 = vunpack.c.h.b16 %v451
        %v637 = vunpack.c.l.b16 %v452
        %v638 = vunpack.c.h.b16 %v452
        %v639 = vunpack.c.l.b16 %v453
        %v640 = vunpack.c.h.b16 %v453
        %v641 = vunpack.c.l.b16 %v454
        %v642 = vunpack.c.h.b16 %v454
        %v643 = vunpack.c.l.b16 %v455
        %v644 = vunpack.c.h.b16 %v455
        %v645 = vunpack.c.l.b16 %v456
        %v646 = vunpack.c.h.b16 %v456
        %v647 = vunpack.c.l.b16 %v457
        %v648 = vunpack.c.h.b16 %v457
        %v649 = vunpack.c.l.b16 %v458
        %v650 = vunpack.c.h.b16 %v458
        %v651 = vunpack.c.l.b16 %v459
        %v652 = vunpack.c.h.b16 %v459
        %v653 = vunpack.c.l.b16 %v460
        %v654 = vunpack.c.h.b16 %v460
        %v655 = vunpack.c.l.b16 %v461
        %v656 = vunpack.c.h.b16 %v461
        %v657 = vunpack.c.l.b16 %v462
        %v658 = vunpack.c.h.b16 %v462
        %v659 = vunpack.c.l.b16 %v463
        %v660 = vunpack.c.h.b16 %v463
        %v661 = vunpack.c.l.b16 %v464
        %v662 = vunpack.c.h.b16 %v464
        %v663 = vunpack.c.l.b16 %v465
        %v664 = vunpack.c.h.b16 %v465
        %v665 = vunpack.c.l.b16 %v466
        %v666 = vunpack.c.h.b16 %v466
        %v667 = vunpack.c.l.b16 %v467
        %v668 = vunpack.c.h.b16 %v467
        %v669 = vunpack.c.l.b16 %v468
        %v670 = vunpack.c.h.b16 %v468
        %v671 = vunpack.c.l.b16 %v469
        %v672 = vunpack.c.h.b16 %v469
        %v673 = vunpack.c.l.b16 %v470
        %v674 = vunpack.c.h.b16 %v470
        %v675 = vunpack.c.l.b16 %v471
        %v676 = vunpack.c.h.b16 %v471
        %v677 = vunpack.c.l.b16 %v472
        %v678 = vunpack.c.h.b16 %v472
        %v679 = vunpack.c.l.b16 %v473
        %v680 = vunpack.c.h.b16 %v473
        %v681 = vunpack.c.l.b16 %v474
        %v682 = vunpack.c.h.b16 %v474
        %v683 = vunpack.c.l.b16 %v475
        %v684 = vunpack.c.h.b16 %v475
        %v685 = vunpack.c.l.b16 %v476
        %v686 = vunpack.c.h.b16 %v476
        %v687 = vunpack.c.l.b16 %v477
        %v688 = vunpack.c.h.b16 %v477
        %v689 = vunpack.c.l.b16 %v478
        %v690 = vunpack.c.h.b16 %v478
        %v691 = vpack.c.b16 %v601, %v595
        %v692 = vpack.c.b16 %v602, %v596
        %v693 = vpack.c.b16 %v603, %v597
        %v694 = vpack.c.b16 %v604, %v598
        %v695 = vpack.c.b16 %v605, %v599
        %v696 = vpack.c.b16 %v606, %v600
        %v697 = vpack.c.b16 %v613, %v607
        %v698 = vpack.c.b16 %v614, %v608
        %v699 = vpack.c.b16 %v615, %v609
        %v700 = vpack.c.b16 %v616, %v610
        %v701 = vpack.c.b16 %v617, %v611
        %v702 = vpack.c.b16 %v618, %v612
        %v703 = vpack.c.b16 %v625, %v619
        %v704 = vpack.c.b16 %v626, %v620
        %v705 = vpack.c.b16 %v627, %v621
        %v706 = vpack.c.b16 %v628, %v622
        %v707 = vpack.c.b16 %v629, %v623
        %v708 = vpack.c.b16 %v630, %v624
        %v709 = vpack.c.b16 %v637, %v631
        %v710 = vpack.c.b16 %v638, %v632
        %v711 = vpack.c.b16 %v639, %v633
        %v712 = vpack.c.b16 %v640, %v634
        %v713 = vpack.c.b16 %v641, %v635
        %v714 = vpack.c.b16 %v642, %v636
        %v715 = vpack.c.b16 %v649, %v643
        %v716 = vpack.c.b16 %v650, %v644
        %v717 = vpack.c.b16 %v651, %v645
        %v718 = vpack.c.b16 %v652, %v646
        %v719 = vpack.c.b16 %v653, %v647
        %v720 = vpack.c.b16 %v654, %v648
        %v721 = vpack.c.b16 %v661, %v655
        %v722 = vpack.c.b16 %v662, %v656
        %v723 = vpack.c.b16 %v663, %v657
        %v724 = vpack.c.b16 %v664, %v658
        %v725 = vpack.c.b16 %v665, %v659
        %v726 = vpack.c.b16 %v666, %v660
        %v727 = vpack.c.b16 %v673, %v667
        %v728 = vpack.c.b16 %v674, %v668
        %v729 = vpack.c.b16 %v675, %v669
        %v730 = vpack.c.b16 %v676, %v670
        %v731 = vpack.c.b16 %v677, %v671
        %v732 = vpack.c.b16 %v678, %v672
        %v733 = vpack.c.b16 %v685, %v679
        %v734 = vpack.c.b16 %v686, %v680
        %v735 = vpack.c.b16 %v687, %v681
        %v736 = vpack.c.b16 %v688, %v682
        %v737 = vpack.c.b16 %v689, %v683
        %v738 = vpack.c.b16 %v690, %v684
        %787 = vmatprep.subr.bf16.mxu0 %v692
        %788 = vmatpush1.bf16.msra.mxu0 %v691
        %789 = vmatprep.subr.bf16.mxu0 %v698
        %790 = vmatpush1.bf16.msra.mxu0 %v697
        %791 = vmatprep.subr.bf16.mxu0 %v704
        %792 = vmatpush1.bf16.msra.mxu0 %v703
        %793 = vmatprep.subr.bf16.mxu0 %v710
        %794 = vmatpush1.bf16.msra.mxu0 %v709
        %795 = vmatprep.subr.bf16.mxu0 %v716
        %796 = vmatpush1.bf16.msra.mxu0 %v715
        %797 = vmatprep.subr.bf16.mxu0 %v722
        %798 = vmatpush1.bf16.msra.mxu0 %v721
        %799 = vmatprep.subr.bf16.mxu0 %v728
        %800 = vmatpush1.bf16.msra.mxu0 %v727
        %801 = vmatprep.subr.bf16.mxu0 %v734
        %802 = vmatpush1.bf16.msra.mxu0 %v733
        %803 = vmatprep.subr.bf16.mxu0 0
        %804 = vmatpush1.bf16.msra.mxu0 0
        %805 = vmatprep.subr.bf16.mxu0 0
        %806 = vmatpush1.bf16.msra.mxu0 0
        %807 = vmatprep.subr.bf16.mxu0 0
        %808 = vmatpush1.bf16.msra.mxu0 0
        %809 = vmatprep.subr.bf16.mxu0 0
        %810 = vmatpush1.bf16.msra.mxu0 0
        %811 = vmatprep.subr.bf16.mxu0 0
        %812 = vmatpush1.bf16.msra.mxu0 0
        %813 = vmatprep.subr.bf16.mxu0 0
        %814 = vmatpush1.bf16.msra.mxu0 0
        %815 = vmatprep.subr.bf16.mxu0 0
        %816 = vmatpush1.bf16.msra.mxu0 0
        %817 = vmatprep.subr.bf16.mxu0 0
        %818 = vmatpush1.bf16.msra.mxu0 0
        %819 = vmatprep.mubr.bf16.mxu0 0
        %820 = vmatmul.mubr.bf16.gmra.mrb[0].mxu0 %v540
        %v821 = vpop.f32.mrb[0].mxu0
        %v822 = vadd.f32 0.0, %v821
        %v823 = vpop.f32.mrb[0].mxu0
        %v824 = vadd.f32 0.0, %v823
        %v825 = vpop.f32.mrb[0].mxu0
        %v826 = vpop.f32.mrb[0].mxu0
        %827 = vdwg.mxu0
        %828 = vmatprep.subr.bf16.mxu0 %v694
        %829 = vmatpush1.bf16.msra.mxu0 %v693
        %830 = vmatprep.subr.bf16.mxu0 %v700
        %831 = vmatpush1.bf16.msra.mxu0 %v699
        %832 = vmatprep.subr.bf16.mxu0 %v706
        %833 = vmatpush1.bf16.msra.mxu0 %v705
        %834 = vmatprep.subr.bf16.mxu0 %v712
        %835 = vmatpush1.bf16.msra.mxu0 %v711
        %836 = vmatprep.subr.bf16.mxu0 %v718
        %837 = vmatpush1.bf16.msra.mxu0 %v717
        %838 = vmatprep.subr.bf16.mxu0 %v724
        %839 = vmatpush1.bf16.msra.mxu0 %v723
        %840 = vmatprep.subr.bf16.mxu0 %v730
        %841 = vmatpush1.bf16.msra.mxu0 %v729
        %842 = vmatprep.subr.bf16.mxu0 %v736
        %843 = vmatpush1.bf16.msra.mxu0 %v735
        %844 = vmatprep.subr.bf16.mxu0 0
        %845 = vmatpush1.bf16.msra.mxu0 0
        %846 = vmatprep.subr.bf16.mxu0 0
        %847 = vmatpush1.bf16.msra.mxu0 0
        %848 = vmatprep.subr.bf16.mxu0 0
        %849 = vmatpush1.bf16.msra.mxu0 0
        %850 = vmatprep.subr.bf16.mxu0 0
        %851 = vmatpush1.bf16.msra.mxu0 0
        %852 = vmatprep.subr.bf16.mxu0 0
        %853 = vmatpush1.bf16.msra.mxu0 0
        %854 = vmatprep.subr.bf16.mxu0 0
        %855 = vmatpush1.bf16.msra.mxu0 0
        %856 = vmatprep.subr.bf16.mxu0 0
        %857 = vmatpush1.bf16.msra.mxu0 0
        %858 = vmatprep.subr.bf16.mxu0 0
        %859 = vmatpush1.bf16.msra.mxu0 0
        %860 = vmatprep.mubr.bf16.mxu0 0
        %861 = vmatmul.mubr.bf16.gmra.mrb[0].mxu0 %v540
        %v862 = vpop.f32.mrb[0].mxu0
        %v863 = vadd.f32 0.0, %v862
        %v864 = vpop.f32.mrb[0].mxu0
        %v865 = vadd.f32 0.0, %v864
        %v866 = vpop.f32.mrb[0].mxu0
        %v867 = vpop.f32.mrb[0].mxu0
        %868 = vdwg.mxu0
        %869 = vmatprep.subr.bf16.mxu0 %v696
        %870 = vmatpush1.bf16.msra.mxu0 %v695
        %871 = vmatprep.subr.bf16.mxu0 %v702
        %872 = vmatpush1.bf16.msra.mxu0 %v701
        %873 = vmatprep.subr.bf16.mxu0 %v708
        %874 = vmatpush1.bf16.msra.mxu0 %v707
        %875 = vmatprep.subr.bf16.mxu0 %v714
        %876 = vmatpush1.bf16.msra.mxu0 %v713
        %877 = vmatprep.subr.bf16.mxu0 %v720
        %878 = vmatpush1.bf16.msra.mxu0 %v719
        %879 = vmatprep.subr.bf16.mxu0 %v726
        %880 = vmatpush1.bf16.msra.mxu0 %v725
        %881 = vmatprep.subr.bf16.mxu0 %v732
        %882 = vmatpush1.bf16.msra.mxu0 %v731
        %883 = vmatprep.subr.bf16.mxu0 %v738
        %884 = vmatpush1.bf16.msra.mxu0 %v737
        %885 = vmatprep.subr.bf16.mxu0 0
        %886 = vmatpush1.bf16.msra.mxu0 0
        %887 = vmatprep.subr.bf16.mxu0 0
        %888 = vmatpush1.bf16.msra.mxu0 0
        %889 = vmatprep.subr.bf16.mxu0 0
        %890 = vmatpush1.bf16.msra.mxu0 0
        %891 = vmatprep.subr.bf16.mxu0 0
        %892 = vmatpush1.bf16.msra.mxu0 0
        %893 = vmatprep.subr.bf16.mxu0 0
        %894 = vmatpush1.bf16.msra.mxu0 0
        %895 = vmatprep.subr.bf16.mxu0 0
        %896 = vmatpush1.bf16.msra.mxu0 0
        %897 = vmatprep.subr.bf16.mxu0 0
        %898 = vmatpush1.bf16.msra.mxu0 0
        %899 = vmatprep.subr.bf16.mxu0 0
        %900 = vmatpush1.bf16.msra.mxu0 0
        %901 = vmatprep.mubr.bf16.mxu0 0
        %902 = vmatmul.mubr.bf16.gmra.mrb[0].mxu0 %v540
        %v903 = vpop.f32.mrb[0].mxu0
        %v904 = vadd.f32 0.0, %v903
        %v905 = vpop.f32.mrb[0].mxu0
        %v906 = vadd.f32 0.0, %v905
        %v907 = vpop.f32.mrb[0].mxu0
        %v908 = vpop.f32.mrb[0].mxu0
        %909 = vdwg.mxu0
        %v910 = vadd.f32 %v541, %v822
        %v911 = vadd.f32 %v542, %v824
        %v912 = vadd.f32 %v543, %v863
        %v913 = vadd.f32 %v544, %v865
        %v914 = vadd.f32 %v545, %v904
        %v915 = vadd.f32 %v546, %v906
        %916 = vst [vmem:[#allocation2] sm:$0xff] %v910
        %917 = vst [vmem:[#allocation2 + $0x8] sm:$0xff] %v911
        %918 = vst [vmem:[#allocation2 + $0x10] sm:$0xff] %v912
        %919 = vst [vmem:[#allocation2 + $0x18] sm:$0xff] %v913
        %920 = vst [vmem:[#allocation2 + $0x20] sm:$0xff] %v914
        %921 = vst [vmem:[#allocation2 + $0x28] sm:$0xff] %v915
        %v922 = vld [vmem:[#allocation3] sm:$0xff]
        %v923 = vsel %vm526, %v479, 0.0
        %924 = vadd.xlane.f32.xlu0 %v923
        %v925 = vpop.xlane.xlu0 %924
        %v926 = vadd.f32 %v922, %v925
        %vm927 = vcmask 7168
        %928 = vst.msk [vmem:[#allocation3] sm:$0xff] %vm927, %v926
        %p929 = scmp.eq.s32.totalorder %s38, 1
        // Predicated region
        $region61: #{tpu_custom_call.1} parent=39 // pred_check
          %p930 = pneg %p929
        $region62: #{tpu_custom_call.1} parent=39 // pred_check_branch
          %932 = sbr.rel (%p930) target = $region64
        $region63: #{tpu_custom_call.1} parent=39 // pred_region
          %v933 = vld [vmem:[#allocation3] sm:$0xff]
          %v934 = vmax.f32 %v933, 1.0
          %v935 = vld [vmem:[#allocation2] sm:$0xff]
          %v936 = vld [vmem:[#allocation2 + $0x8] sm:$0xff]
          %v937 = vld [vmem:[#allocation2 + $0x10] sm:$0xff]
          %v938 = vld [vmem:[#allocation2 + $0x18] sm:$0xff]
          %v939 = vld [vmem:[#allocation2 + $0x20] sm:$0xff]
          %v940 = vld [vmem:[#allocation2 + $0x28] sm:$0xff]
          %942 = vset.pattern.permute.xlu0 0
          %943 = vperm.xlu0 %942, %v934
          %v944 = vpop.permute.xlu0 %943
          %v946 = vrcp.pop %v944
          %v947 = vmul.f32 %v935, %v946
          %v948 = vmul.f32 %v936, %v946
          %v949 = vmul.f32 %v937, %v946
          %v950 = vmul.f32 %v938, %v946
          %v951 = vmul.f32 %v939, %v946
          %v952 = vmul.f32 %v940, %v946
          %v953 = vld [vmem:[%s3] sm:$0x1]
          %v954 = vld [vmem:[%s3 + $0x1] sm:$0x1]
          %v955 = vld [vmem:[#allocation9] sm:$0xff]
          %v956 = vld [vmem:[#allocation9 + $0x8] sm:$0xff]
          %v957 = vld [vmem:[#allocation9 + $0x10] sm:$0xff]
          %v958 = vld [vmem:[#allocation9 + $0x18] sm:$0xff]
          %v959 = vld [vmem:[#allocation9 + $0x20] sm:$0xff]
          %v960 = vld [vmem:[#allocation9 + $0x28] sm:$0xff]
          %v961 = vld [vmem:[#allocation9 + $0x30] sm:$0xff]
          %v962 = vld [vmem:[#allocation9 + $0x38] sm:$0xff]
          %v963 = vld [vmem:[#allocation9 + $0x40] sm:$0xff]
          %v964 = vld [vmem:[#allocation9 + $0x48] sm:$0xff]
          %v965 = vld [vmem:[#allocation9 + $0x50] sm:$0xff]
          %v966 = vld [vmem:[#allocation9 + $0x58] sm:$0xff]
          %v967 = vld [vmem:[#allocation9 + $0x60] sm:$0xff]
          %v968 = vld [vmem:[#allocation9 + $0x68] sm:$0xff]
          %v969 = vld [vmem:[#allocation9 + $0x70] sm:$0xff]
          %v970 = vld [vmem:[#allocation9 + $0x78] sm:$0xff]
          %v971 = vld [vmem:[#allocation9 + $0x80] sm:$0xff]
          %v972 = vld [vmem:[#allocation9 + $0x88] sm:$0xff]
          %v973 = vld [vmem:[#allocation9 + $0x90] sm:$0xff]
          %v974 = vld [vmem:[#allocation9 + $0x98] sm:$0xff]
          %v975 = vld [vmem:[#allocation9 + $0xa0] sm:$0xff]
          %v976 = vld [vmem:[#allocation9 + $0xa8] sm:$0xff]
          %v977 = vld [vmem:[#allocation9 + $0xb0] sm:$0xff]
          %v978 = vld [vmem:[#allocation9 + $0xb8] sm:$0xff]
          %v979 = vld [vmem:[#allocation9 + $0xc0] sm:$0xff]
          %v980 = vld [vmem:[#allocation9 + $0xc8] sm:$0xff]
          %v981 = vld [vmem:[#allocation9 + $0xd0] sm:$0xff]
          %v982 = vld [vmem:[#allocation9 + $0xd8] sm:$0xff]
          %v983 = vld [vmem:[#allocation9 + $0xe0] sm:$0xff]
          %v984 = vld [vmem:[#allocation9 + $0xe8] sm:$0xff]
          %v985 = vld [vmem:[#allocation9 + $0xf0] sm:$0xff]
          %v986 = vld [vmem:[#allocation9 + $0xf8] sm:$0xff]
          %v987 = vld [vmem:[#allocation9 + $0x100] sm:$0xff]
          %v988 = vld [vmem:[#allocation9 + $0x108] sm:$0xff]
          %v989 = vld [vmem:[#allocation9 + $0x110] sm:$0xff]
          %v990 = vld [vmem:[#allocation9 + $0x118] sm:$0xff]
          %v991 = vld [vmem:[#allocation9 + $0x120] sm:$0xff]
          %v992 = vld [vmem:[#allocation9 + $0x128] sm:$0xff]
          %v993 = vld [vmem:[#allocation9 + $0x130] sm:$0xff]
          %v994 = vld [vmem:[#allocation9 + $0x138] sm:$0xff]
          %v995 = vld [vmem:[#allocation9 + $0x140] sm:$0xff]
          %v996 = vld [vmem:[#allocation9 + $0x148] sm:$0xff]
          %v997 = vld [vmem:[#allocation9 + $0x150] sm:$0xff]
          %v998 = vld [vmem:[#allocation9 + $0x158] sm:$0xff]
          %v999 = vld [vmem:[#allocation9 + $0x160] sm:$0xff]
          %v1000 = vld [vmem:[#allocation9 + $0x168] sm:$0xff]
          %v1001 = vld [vmem:[#allocation9 + $0x170] sm:$0xff]
          %v1002 = vld [vmem:[#allocation9 + $0x178] sm:$0xff]
          %v1003 = vld [vmem:[#allocation9 + $0x180] sm:$0xff]
          %v1004 = vld [vmem:[#allocation9 + $0x188] sm:$0xff]
          %v1005 = vld [vmem:[#allocation9 + $0x190] sm:$0xff]
          %v1006 = vld [vmem:[#allocation9 + $0x198] sm:$0xff]
          %v1007 = vld [vmem:[#allocation9 + $0x1a0] sm:$0xff]
          %v1008 = vld [vmem:[#allocation9 + $0x1a8] sm:$0xff]
          %v1009 = vld [vmem:[#allocation9 + $0x1b0] sm:$0xff]
          %v1010 = vld [vmem:[#allocation9 + $0x1b8] sm:$0xff]
          %v1011 = vld [vmem:[#allocation9 + $0x1c0] sm:$0xff]
          %v1012 = vld [vmem:[#allocation9 + $0x1c8] sm:$0xff]
          %v1013 = vld [vmem:[#allocation9 + $0x1d0] sm:$0xff]
          %v1014 = vld [vmem:[#allocation9 + $0x1d8] sm:$0xff]
          %v1015 = vld [vmem:[#allocation9 + $0x1e0] sm:$0xff]
          %v1016 = vld [vmem:[#allocation9 + $0x1e8] sm:$0xff]
          %v1017 = vld [vmem:[#allocation9 + $0x1f0] sm:$0xff]
          %v1018 = vld [vmem:[#allocation9 + $0x1f8] sm:$0xff]
          %v1019 = vld [vmem:[#allocation9 + $0x200] sm:$0xff]
          %v1020 = vld [vmem:[#allocation9 + $0x208] sm:$0xff]
          %v1021 = vld [vmem:[#allocation9 + $0x210] sm:$0xff]
          %v1022 = vld [vmem:[#allocation9 + $0x218] sm:$0xff]
          %v1023 = vld [vmem:[#allocation9 + $0x220] sm:$0xff]
          %v1024 = vld [vmem:[#allocation9 + $0x228] sm:$0xff]
          %v1025 = vld [vmem:[#allocation9 + $0x230] sm:$0xff]
          %v1026 = vld [vmem:[#allocation9 + $0x238] sm:$0xff]
          %v1027 = vld [vmem:[#allocation9 + $0x240] sm:$0xff]
          %v1028 = vld [vmem:[#allocation9 + $0x248] sm:$0xff]
          %v1029 = vld [vmem:[#allocation9 + $0x250] sm:$0xff]
          %v1030 = vld [vmem:[#allocation9 + $0x258] sm:$0xff]
          %v1031 = vld [vmem:[#allocation9 + $0x260] sm:$0xff]
          %v1032 = vld [vmem:[#allocation9 + $0x268] sm:$0xff]
          %v1033 = vld [vmem:[#allocation9 + $0x270] sm:$0xff]
          %v1034 = vld [vmem:[#allocation9 + $0x278] sm:$0xff]
          %v1035 = vld [vmem:[#allocation9 + $0x280] sm:$0xff]
          %v1036 = vld [vmem:[#allocation9 + $0x288] sm:$0xff]
          %v1037 = vld [vmem:[#allocation9 + $0x290] sm:$0xff]
          %v1038 = vld [vmem:[#allocation9 + $0x298] sm:$0xff]
          %v1039 = vld [vmem:[#allocation9 + $0x2a0] sm:$0xff]
          %v1040 = vld [vmem:[#allocation9 + $0x2a8] sm:$0xff]
          %v1041 = vld [vmem:[#allocation9 + $0x2b0] sm:$0xff]
          %v1042 = vld [vmem:[#allocation9 + $0x2b8] sm:$0xff]
          %v1043 = vld [vmem:[#allocation9 + $0x2c0] sm:$0xff]
          %v1044 = vld [vmem:[#allocation9 + $0x2c8] sm:$0xff]
          %v1045 = vld [vmem:[#allocation9 + $0x2d0] sm:$0xff]
          %v1046 = vld [vmem:[#allocation9 + $0x2d8] sm:$0xff]
          %v1047 = vld [vmem:[#allocation9 + $0x2e0] sm:$0xff]
          %v1048 = vld [vmem:[#allocation9 + $0x2e8] sm:$0xff]
          %v1049 = vld [vmem:[#allocation9 + $0x2f0] sm:$0xff]
          %v1050 = vld [vmem:[#allocation9 + $0x2f8] sm:$0xff]
          %v1051 = vlaneseq
          %v1052 = vshrl.u32 %v1051, 7
          %v1053 = vsub.s32 0, %v1052
          %v1054 = vrot.slane %v953, %v1053
          %1055 = vmatprep.subr.mxu0 0.0
          %1056 = vmatpush1.msra.mxu0 %v955
          %1057 = vmatprep.subr.mxu0 0.0
          %1058 = vmatpush1.msra.mxu0 %v956
          %1059 = vmatprep.subr.mxu0 0.0
          %1060 = vmatpush1.msra.mxu0 %v957
          %1061 = vmatprep.subr.mxu0 0.0
          %1062 = vmatpush1.msra.mxu0 %v958
          %1063 = vmatprep.subr.mxu0 0.0
          %1064 = vmatpush1.msra.mxu0 %v959
          %1065 = vmatprep.subr.mxu0 0.0
          %1066 = vmatpush1.msra.mxu0 %v960
          %1067 = vmatprep.subr.mxu0 0.0
          %1068 = vmatpush1.msra.mxu0 %v961
          %1069 = vmatprep.subr.mxu0 0.0
          %1070 = vmatpush1.msra.mxu0 %v962
          %1071 = vmatprep.subr.mxu0 0.0
          %1072 = vmatpush1.msra.mxu0 %v963
          %1073 = vmatprep.subr.mxu0 0.0
          %1074 = vmatpush1.msra.mxu0 %v964
          %1075 = vmatprep.subr.mxu0 0.0
          %1076 = vmatpush1.msra.mxu0 %v965
          %1077 = vmatprep.subr.mxu0 0.0
          %1078 = vmatpush1.msra.mxu0 %v966
          %1079 = vmatprep.subr.mxu0 0.0
          %1080 = vmatpush1.msra.mxu0 %v967
          %1081 = vmatprep.subr.mxu0 0.0
          %1082 = vmatpush1.msra.mxu0 %v968
          %1083 = vmatprep.subr.mxu0 0.0
          %1084 = vmatpush1.msra.mxu0 %v969
          %1085 = vmatprep.subr.mxu0 0.0
          %1086 = vmatpush1.msra.mxu0 %v970
          %1087 = vmatprep.subr.mxu0 0.0
          %1088 = vmatpush1.msra.mxu0 %v971
          %1089 = vmatprep.subr.mxu0 0.0
          %1090 = vmatpush1.msra.mxu0 %v972
          %1091 = vmatprep.subr.mxu0 0.0
          %1092 = vmatpush1.msra.mxu0 %v973
          %1093 = vmatprep.subr.mxu0 0.0
          %1094 = vmatpush1.msra.mxu0 %v974
          %1095 = vmatprep.subr.mxu0 0.0
          %1096 = vmatpush1.msra.mxu0 %v975
          %1097 = vmatprep.subr.mxu0 0.0
          %1098 = vmatpush1.msra.mxu0 %v976
          %1099 = vmatprep.subr.mxu0 0.0
          %1100 = vmatpush1.msra.mxu0 %v977
          %1101 = vmatprep.subr.mxu0 0.0
          %1102 = vmatpush1.msra.mxu0 %v978
          %1103 = vmatprep.subr.mxu0 0.0
          %1104 = vmatpush1.msra.mxu0 %v979
          %1105 = vmatprep.subr.mxu0 0.0
          %1106 = vmatpush1.msra.mxu0 %v980
          %1107 = vmatprep.subr.mxu0 0.0
          %1108 = vmatpush1.msra.mxu0 %v981
          %1109 = vmatprep.subr.mxu0 0.0
          %1110 = vmatpush1.msra.mxu0 %v982
          %1111 = vmatprep.subr.mxu0 0.0
          %1112 = vmatpush1.msra.mxu0 %v983
          %1113 = vmatprep.subr.mxu0 0.0
          %1114 = vmatpush1.msra.mxu0 %v984
          %1115 = vmatprep.subr.mxu0 0.0
          %1116 = vmatpush1.msra.mxu0 %v985
          %1117 = vmatprep.subr.mxu0 0.0
          %1118 = vmatpush1.msra.mxu0 %v986
          %1119 = vmatprep.mubr.f32.mxu0 %v948
          %1120 = vmatmul.mubr.f32.gmra.mrb[0].mxu0 %v947
          %v1121 = vpop.f32.mrb[0].mxu0
          %v1122 = vadd.f32 %v1054, %v1121
          %v1123 = vpop.f32.mrb[0].mxu0
          %1124 = vdwg.mxu0
          %1125 = vmatprep.subr.mxu0 0.0
          %1126 = vmatpush1.msra.mxu0 %v987
          %1127 = vmatprep.subr.mxu0 0.0
          %1128 = vmatpush1.msra.mxu0 %v988
          %1129 = vmatprep.subr.mxu0 0.0
          %1130 = vmatpush1.msra.mxu0 %v989
          %1131 = vmatprep.subr.mxu0 0.0
          %1132 = vmatpush1.msra.mxu0 %v990
          %1133 = vmatprep.subr.mxu0 0.0
          %1134 = vmatpush1.msra.mxu0 %v991
          %1135 = vmatprep.subr.mxu0 0.0
          %1136 = vmatpush1.msra.mxu0 %v992
          %1137 = vmatprep.subr.mxu0 0.0
          %1138 = vmatpush1.msra.mxu0 %v993
          %1139 = vmatprep.subr.mxu0 0.0
          %1140 = vmatpush1.msra.mxu0 %v994
          %1141 = vmatprep.subr.mxu0 0.0
          %1142 = vmatpush1.msra.mxu0 %v995
          %1143 = vmatprep.subr.mxu0 0.0
          %1144 = vmatpush1.msra.mxu0 %v996
          %1145 = vmatprep.subr.mxu0 0.0
          %1146 = vmatpush1.msra.mxu0 %v997
          %1147 = vmatprep.subr.mxu0 0.0
          %1148 = vmatpush1.msra.mxu0 %v998
          %1149 = vmatprep.subr.mxu0 0.0
          %1150 = vmatpush1.msra.mxu0 %v999
          %1151 = vmatprep.subr.mxu0 0.0
          %1152 = vmatpush1.msra.mxu0 %v1000
          %1153 = vmatprep.subr.mxu0 0.0
          %1154 = vmatpush1.msra.mxu0 %v1001
          %1155 = vmatprep.subr.mxu0 0.0
          %1156 = vmatpush1.msra.mxu0 %v1002
          %1157 = vmatprep.subr.mxu0 0.0
          %1158 = vmatpush1.msra.mxu0 %v1003
          %1159 = vmatprep.subr.mxu0 0.0
          %1160 = vmatpush1.msra.mxu0 %v1004
          %1161 = vmatprep.subr.mxu0 0.0
          %1162 = vmatpush1.msra.mxu0 %v1005
          %1163 = vmatprep.subr.mxu0 0.0
          %1164 = vmatpush1.msra.mxu0 %v1006
          %1165 = vmatprep.subr.mxu0 0.0
          %1166 = vmatpush1.msra.mxu0 %v1007
          %1167 = vmatprep.subr.mxu0 0.0
          %1168 = vmatpush1.msra.mxu0 %v1008
          %1169 = vmatprep.subr.mxu0 0.0
          %1170 = vmatpush1.msra.mxu0 %v1009
          %1171 = vmatprep.subr.mxu0 0.0
          %1172 = vmatpush1.msra.mxu0 %v1010
          %1173 = vmatprep.subr.mxu0 0.0
          %1174 = vmatpush1.msra.mxu0 %v1011
          %1175 = vmatprep.subr.mxu0 0.0
          %1176 = vmatpush1.msra.mxu0 %v1012
          %1177 = vmatprep.subr.mxu0 0.0
          %1178 = vmatpush1.msra.mxu0 %v1013
          %1179 = vmatprep.subr.mxu0 0.0
          %1180 = vmatpush1.msra.mxu0 %v1014
          %1181 = vmatprep.subr.mxu0 0.0
          %1182 = vmatpush1.msra.mxu0 %v1015
          %1183 = vmatprep.subr.mxu0 0.0
          %1184 = vmatpush1.msra.mxu0 %v1016
          %1185 = vmatprep.subr.mxu0 0.0
          %1186 = vmatpush1.msra.mxu0 %v1017
          %1187 = vmatprep.subr.mxu0 0.0
          %1188 = vmatpush1.msra.mxu0 %v1018
          %1189 = vmatprep.mubr.f32.mxu0 %v950
          %1190 = vmatmul.mubr.f32.gmra.mrb[0].mxu0 %v949
          %v1191 = vpop.f32.mrb[0].mxu0
          %v1192 = vadd.f32 %v1122, %v1191
          %v1193 = vpop.f32.mrb[0].mxu0
          %1194 = vdwg.mxu0
          %1195 = vmatprep.subr.mxu0 0.0
          %1196 = vmatpush1.msra.mxu0 %v1019
          %1197 = vmatprep.subr.mxu0 0.0
          %1198 = vmatpush1.msra.mxu0 %v1020
          %1199 = vmatprep.subr.mxu0 0.0
          %1200 = vmatpush1.msra.mxu0 %v1021
          %1201 = vmatprep.subr.mxu0 0.0
          %1202 = vmatpush1.msra.mxu0 %v1022
          %1203 = vmatprep.subr.mxu0 0.0
          %1204 = vmatpush1.msra.mxu0 %v1023
          %1205 = vmatprep.subr.mxu0 0.0
          %1206 = vmatpush1.msra.mxu0 %v1024
          %1207 = vmatprep.subr.mxu0 0.0
          %1208 = vmatpush1.msra.mxu0 %v1025
          %1209 = vmatprep.subr.mxu0 0.0
          %1210 = vmatpush1.msra.mxu0 %v1026
          %1211 = vmatprep.subr.mxu0 0.0
          %1212 = vmatpush1.msra.mxu0 %v1027
          %1213 = vmatprep.subr.mxu0 0.0
          %1214 = vmatpush1.msra.mxu0 %v1028
          %1215 = vmatprep.subr.mxu0 0.0
          %1216 = vmatpush1.msra.mxu0 %v1029
          %1217 = vmatprep.subr.mxu0 0.0
          %1218 = vmatpush1.msra.mxu0 %v1030
          %1219 = vmatprep.subr.mxu0 0.0
          %1220 = vmatpush1.msra.mxu0 %v1031
          %1221 = vmatprep.subr.mxu0 0.0
          %1222 = vmatpush1.msra.mxu0 %v1032
          %1223 = vmatprep.subr.mxu0 0.0
          %1224 = vmatpush1.msra.mxu0 %v1033
          %1225 = vmatprep.subr.mxu0 0.0
          %1226 = vmatpush1.msra.mxu0 %v1034
          %1227 = vmatprep.subr.mxu0 0.0
          %1228 = vmatpush1.msra.mxu0 %v1035
          %1229 = vmatprep.subr.mxu0 0.0
          %1230 = vmatpush1.msra.mxu0 %v1036
          %1231 = vmatprep.subr.mxu0 0.0
          %1232 = vmatpush1.msra.mxu0 %v1037
          %1233 = vmatprep.subr.mxu0 0.0
          %1234 = vmatpush1.msra.mxu0 %v1038
          %1235 = vmatprep.subr.mxu0 0.0
          %1236 = vmatpush1.msra.mxu0 %v1039
          %1237 = vmatprep.subr.mxu0 0.0
          %1238 = vmatpush1.msra.mxu0 %v1040
          %1239 = vmatprep.subr.mxu0 0.0
          %1240 = vmatpush1.msra.mxu0 %v1041
          %1241 = vmatprep.subr.mxu0 0.0
          %1242 = vmatpush1.msra.mxu0 %v1042
          %1243 = vmatprep.subr.mxu0 0.0
          %1244 = vmatpush1.msra.mxu0 %v1043
          %1245 = vmatprep.subr.mxu0 0.0
          %1246 = vmatpush1.msra.mxu0 %v1044
          %1247 = vmatprep.subr.mxu0 0.0
          %1248 = vmatpush1.msra.mxu0 %v1045
          %1249 = vmatprep.subr.mxu0 0.0
          %1250 = vmatpush1.msra.mxu0 %v1046
          %1251 = vmatprep.subr.mxu0 0.0
          %1252 = vmatpush1.msra.mxu0 %v1047
          %1253 = vmatprep.subr.mxu0 0.0
          %1254 = vmatpush1.msra.mxu0 %v1048
          %1255 = vmatprep.subr.mxu0 0.0
          %1256 = vmatpush1.msra.mxu0 %v1049
          %1257 = vmatprep.subr.mxu0 0.0
          %1258 = vmatpush1.msra.mxu0 %v1050
          %1259 = vmatprep.mubr.f32.mxu0 %v952
          %1260 = vmatmul.mubr.f32.gmra.mrb[0].mxu0 %v951
          %v1261 = vpop.f32.mrb[0].mxu0
          %v1262 = vadd.f32 %v1192, %v1261
          %v1263 = vpop.f32.mrb[0].mxu0
          %1264 = vdwg.mxu0
          %1265 = vst [vmem:[%s408] sm:$0xff] %v1262
          %v1266 = vld [vmem:[%s372] sm:$0xff]
          %v1267 = vlaneseq
          %v1268 = vand.u32 %v1267, 127
          %vm1269 = vcmp.lt.s32.totalorder %v1268, 9
          %v1270 = vsel %vm1269, 1, 0
          %v1271 = vcvt.s32.f32 %v1270
          %vm1272 = vcmp.ge.s32.totalorder %v1268, 9
          %vm1273 = vcmp.lt.s32.totalorder %v1268, 12
          %vm1274 = vmand %vm1272, %vm1273
          %v1275 = vsel %vm1274, 1, 0
          %v1276 = vcvt.s32.f32 %v1275
          %vm1277 = vcmp.gt.f32.partialorder %v1271, 0.0
          %v1278 = vsel %vm1277, %v1262, -1e+30
          %1279 = vmax.xlane.f32.xlu0 %v1278
          %v1280 = vpop.xlane.xlu0 %1279
          %v1281 = vsub.f32 %v1278, %v1280
          %v1282 = vmul.f32 %v1281, 1.442695
          %v1283 = vpow.pop %v1282
          %v1284 = vmul.f32 %v1283, %v1271
          %1285 = vadd.xlane.f32.xlu0 %v1284
          %v1286 = vpop.xlane.xlu0 %1285
          %v1287 = vrcp.pop %v1286
          %v1288 = vmul.f32 %v1286, %v1287
          %v1289 = vsub.f32 2.0, %v1288
          %v1290 = vmul.f32 %v1287, %v1289
          %v1291 = vmul.f32 %v1284, %v1290
          %v1292 = vmul.f32 %v1291, %v1266
          %1293 = vadd.xlane.f32.xlu0 %v1292
          %v1294 = vpop.xlane.xlu0 %1293
          %v1295 = vmax.f32 %v1294, 1e-12
          %v1296 = vlog2.pop %v1295
          %v1297 = vmul.f32 %v1296, 0.6931472
          %v1298 = vmul.f32 %v1297, 0.4
          %v1299 = vmul.f32 %v1298, 1.442695
          %v1300 = vpow.pop %v1299
          %v1301 = vsub.f32 1.0, %v1300
          %v1302 = vrcp.pop 0.4
          %v1303 = vmul.f32 %v1301, %v1302
          %v1304 = vlaneseq
          %v1305 = vshrl.u32 %v1304, 7
          %v1306 = vsub.s32 0, %v1305
          %v1307 = vrot.slane %v954, %v1306
          %v1308 = vmul.f32 %v1307, %v1266
          %v1309 = vmul.f32 %v1308, %v1271
          %1310 = vadd.xlane.f32.xlu0 %v1309
          %v1311 = vpop.xlane.xlu0 %1310
          %v1312 = vmul.f32 %v1303, 0.0
          %v1313 = vmul.f32 %v1303, %v1311
          %v1314 = vadd.f32 %v1312, %v1313
          %vm1315 = vcmp.gt.f32.partialorder %v1276, 0.0
          %v1316 = vsel %vm1315, %v1262, -1e+30
          %1317 = vmax.xlane.f32.xlu0 %v1316
          %v1318 = vpop.xlane.xlu0 %1317
          %v1319 = vsub.f32 %v1316, %v1318
          %v1320 = vmul.f32 %v1319, 1.442695
          %v1321 = vpow.pop %v1320
          %v1322 = vmul.f32 %v1321, %v1276
          %1323 = vadd.xlane.f32.xlu0 %v1322
          %v1324 = vpop.xlane.xlu0 %1323
          %v1325 = vrcp.pop %v1324
          %v1326 = vmul.f32 %v1324, %v1325
          %v1327 = vsub.f32 2.0, %v1326
          %v1328 = vmul.f32 %v1325, %v1327
          %v1329 = vmul.f32 %v1322, %v1328
          %v1330 = vmul.f32 %v1329, %v1266
          %1331 = vadd.xlane.f32.xlu0 %v1330
          %v1332 = vpop.xlane.xlu0 %1331
          %v1333 = vmax.f32 %v1332, 1e-12
          %v1334 = vlog2.pop %v1333
          %v1335 = vmul.f32 %v1334, 0.6931472
          %v1336 = vmul.f32 %v1335, 0.4
          %v1337 = vmul.f32 %v1336, 1.442695
          %v1338 = vpow.pop %v1337
          %v1339 = vsub.f32 1.0, %v1338
          %v1340 = vmul.f32 %v1339, %v1302
          %v1341 = vmul.f32 %v1308, %v1276
          %1342 = vadd.xlane.f32.xlu0 %v1341
          %v1343 = vpop.xlane.xlu0 %1342
          %v1344 = vmul.f32 %v1340, 0.0
          %v1345 = vmul.f32 %v1340, %v1343
          %v1346 = vadd.f32 %v1344, %v1345
          %vm1347 = vcmp.eq.s32.totalorder %v1268, 0
          %vm1348 = vcmp.eq.s32.totalorder %v1268, 1
          %v1349 = vsel %vm1348, %v1346, 0.0
          %v1350 = vsel %vm1347, %v1314, %v1349
          %1351 = vst [vmem:[%s415] sm:$0xff] %v1350
        $region64: #{tpu_custom_call.1} parent=39 // pred_fallthru
          _
        %s1352 = sand.u32 %s177, 1
        %s1353 = scalar_lea.sflag [#allocation6], %s1352
        %s1354 = sand.u32 %s177, 1
        %s1355 = smul.addr %s1354, 8
        %s1356 = scalar_lea.vmem [#allocation12], %s1355
        %s1357 = sand.u32 %s203, 1
        %s1358 = scalar_lea.sflag [#allocation14], %s1357
        %s1359 = sand.u32 %s203, 1
        %s1360 = smul.addr %s1359, 8
        %s1361 = scalar_lea.vmem [#allocation13], %s1360
        // Predicated region
        $region65: #{tpu_custom_call.1} parent=39 // pred_check
          %p1362 = pneg %p187
        $region66: #{tpu_custom_call.1} parent=39 // pred_check_branch
          %1364 = sbr.rel (%p1362) target = $region68
        $region67: #{tpu_custom_call.1} parent=39 // pred_region
          %s1366 = ssub.s32 128, 128
          %1367 = vsyncadd %s1353, %s1366
          %s1368 = smul.addr %s37, 128
          %s1369 = scalar_lea.hbm %s5, %s1368
          %s1371 = sshll.u32 %s1356, 4
          %s1372 = int_to_ptr.vmem [resolvable:$true] %s1371
          %1374 = dma.vmem_to_hbm [thread:$0]  %s1372, 128, %s1369, %s1353
        $region68: #{tpu_custom_call.1} parent=39 // pred_fallthru
          _
        // Predicated region
        $region69: #{tpu_custom_call.1} parent=39 // pred_check
          %p1375 = pneg %p213
        $region70: #{tpu_custom_call.1} parent=39 // pred_check_branch
          %1377 = sbr.rel (%p1375) target = $region72
        $region71: #{tpu_custom_call.1} parent=39 // pred_region
          %s1379 = ssub.s32 128, 128
          %1380 = vsyncadd %s1358, %s1379
          %s1381 = smul.addr %s37, 128
          %s1382 = scalar_lea.hbm %s6, %s1381
          %s1384 = sshll.u32 %s1361, 4
          %s1385 = int_to_ptr.vmem [resolvable:$true] %s1384
          %1387 = dma.vmem_to_hbm [thread:$0]  %s1385, 128, %s1382, %s1358
        $region72: #{tpu_custom_call.1} parent=39 // pred_fallthru
          _
      $region40: #{tpu_custom_call.1} parent=5 // pred_fallthru
        _
      %p1388 = scmp.le.s32.totalorder 2, %s28
      // Predicated region
      $region73: #{tpu_custom_call.1} parent=5 // pred_check
        %p1389 = pneg %p1388
      $region74: #{tpu_custom_call.1} parent=5 // pred_check_branch
        %1391 = sbr.rel (%p1389) target = $region76
      $region75: #{tpu_custom_call.1} parent=5 // pred_region
        %s1392 = ssub.s32 %s28, 2
        // Predicated region
        $region77: #{tpu_custom_call.1} parent=75 // pred_check
          %p1393 = pneg %p193
        $region78: #{tpu_custom_call.1} parent=75 // pred_check_branch
          %1395 = sbr.rel (%p1393) target = $region80
        $region79: #{tpu_custom_call.1} parent=75 // pred_region
          %s1396 = sand.u32 %s178, 1
          %s1397 = scalar_lea.sflag [#allocation6], %s1396
          %s1398 = sand.u32 %s178, 1
          %s1399 = smul.addr %s1398, 8
          %s1400 = scalar_lea.vmem [#allocation12], %s1399
          %1401 = dma.done %s1397, 128
        $region80: #{tpu_custom_call.1} parent=75 // pred_fallthru
          _
        // Predicated region
        $region81: #{tpu_custom_call.1} parent=75 // pred_check
          %p1402 = pneg %p219
        $region82: #{tpu_custom_call.1} parent=75 // pred_check_branch
          %1404 = sbr.rel (%p1402) target = $region84
        $region83: #{tpu_custom_call.1} parent=75 // pred_region
          %s1405 = sand.u32 %s204, 1
          %s1406 = scalar_lea.sflag [#allocation14], %s1405
          %s1407 = sand.u32 %s204, 1
          %s1408 = smul.addr %s1407, 8
          %s1409 = scalar_lea.vmem [#allocation13], %s1408
          %1410 = dma.done %s1406, 128
        $region84: #{tpu_custom_call.1} parent=75 // pred_fallthru
          _
      $region76: #{tpu_custom_call.1} parent=5 // pred_fallthru
        _
    $region6: #{tpu_custom_call.1} parent=1 // loop_footer
      %s32 = sadd.s32 1, %s28
    $region7: #{tpu_custom_call.1} parent=1 // loop_footer_branch
      %27 = sbr.rel target = $region3
    $region8: #{tpu_custom_call.1} parent=1 // loop_exit
      _
    %1411 = vsyncpa [#allocation5], 1
    %s1412 = scalar_lea.sflag [#allocation5], 1
    %1413 = vsyncpa %s1412, 1
    %1414 = vsyncpa [#allocation8], 1
    %s1415 = scalar_lea.sflag [#allocation8], 1
    %1416 = vsyncpa %s1415, 1
    %1417 = vsyncpa [#allocation11], 1
    %s1418 = scalar_lea.sflag [#allocation11], 1
    %1419 = vsyncpa %s1418, 1
    %1420 = vsyncpa [#allocation6], 1
    %s1421 = scalar_lea.sflag [#allocation6], 1
    %1422 = vsyncpa %s1421, 1
    %1423 = vsyncpa [#allocation14], 1
    %s1424 = scalar_lea.sflag [#allocation14], 1
    %1425 = vsyncpa %s1424, 1

</llo_original>
